<compile_context>
chip_gen: v5e
topology: v5e:2x2
jax: 0.10.0
libtpu: 0.0.40
codegen_flags: <defaults>
</compile_context>

<pallas_src>
import functools

import jax
import jax.numpy as jnp
from jax.experimental import pallas as pl
from jax.experimental.pallas import tpu as pltpu

LMK_DIM = 136
LMK_DIM_CONTENT = 128
LMK_DIM_ENC = 64
LMK_DIM_SPK = 128
HIDDEN = LMK_DIM_CONTENT + LMK_DIM_SPK + LMK_DIM_ENC  # 320

_HAS_BUFFERED = hasattr(pl, "Buffered")


def _round_up(x, m):
    return ((x + m - 1) // m) * m


def mixnet_kernel(content_ref, spk_ref, lmk_ref,
                  w_enc_ref, b_enc_ref,
                  w_mid_c_ref, w_mid_s_ref, w_mid_e_ref, b_mid_ref,
                  w_out_ref, b_out_ref,
                  w_sig_ref, b_sig_ref,
                  w_log_ref, b_log_ref,
                  outH_ref, sigma_ref, logits_ref):
    f32 = jnp.float32
    bf16 = jnp.bfloat16

    # lmk encoder: [tm,136] @ [136,64], bf16 operands, f32 MXU accumulation + f32 bias.
    lmk_enc = (jnp.dot(lmk_ref[...].astype(bf16), w_enc_ref[...],
                       preferred_element_type=f32) + b_enc_ref[...])

    # ReLU of the three concat pieces.  ReLU runs in the native input dtype
    # (bf16 VPU on v6e/v7x; Mosaic inserts widening on v5e), then casts to bf16
    # for the MXU.  The concat itself is never materialized — see K-split below.
    c = jnp.maximum(content_ref[...], 0).astype(bf16)          # [tm, 128]
    s = jnp.maximum(spk_ref[...], 0).astype(bf16)              # [tm, 128]
    e = jnp.maximum(lmk_enc, 0.0).astype(bf16)                 # [tm,  64]

    # mid: 320 -> 320 as a K-split accumulation (K = 128 + 128 + 64).  Same MXU
    # work as one K=320 matmul, but avoids building/re-loading a [tm,320] temp.
    h = (jnp.dot(c, w_mid_c_ref[...], preferred_element_type=f32)
         + jnp.dot(s, w_mid_s_ref[...], preferred_element_type=f32)
         + jnp.dot(e, w_mid_e_ref[...], preferred_element_type=f32)
         + b_mid_ref[...])
    hb = h.astype(bf16)

    # Heads (Dropout = identity in eval mode).  Stored directly at their natural
    # widths; default output dtype bf16 halves HBM write traffic.
    outH_ref[...] = (jnp.dot(hb, w_out_ref[...], preferred_element_type=f32)
                     + b_out_ref[...]).astype(outH_ref.dtype)
    sigma_ref[...] = (jnp.dot(hb, w_sig_ref[...], preferred_element_type=f32)
                      + b_sig_ref[...]).astype(sigma_ref.dtype)
    logits_ref[...] = (jnp.dot(hb, w_log_ref[...], preferred_element_type=f32)
                       + b_log_ref[...]).astype(logits_ref.dtype)


def pack_params(params):
    """One-time parameter packing for the kernel (call at load time, NOT per step):
    bf16 weight casts, K-split of the mid weight at lane-aligned row offsets,
    and [1, N] f32 bias slabs."""
    (w_enc, b_enc, w_mid, b_mid, w_out, b_out,
     w_sig, b_sig, w_log, b_log) = params
    bf = jnp.bfloat16
    f32 = jnp.float32
    return dict(
        w_enc=w_enc.astype(bf),
        b_enc=b_enc.reshape(1, -1).astype(f32),
        w_mid_c=w_mid[:LMK_DIM_CONTENT].astype(bf),
        w_mid_s=w_mid[LMK_DIM_CONTENT:LMK_DIM_CONTENT + LMK_DIM_SPK].astype(bf),
        w_mid_e=w_mid[LMK_DIM_CONTENT + LMK_DIM_SPK:].astype(bf),
        b_mid=b_mid.reshape(1, -1).astype(f32),
        w_out=w_out.astype(bf),
        b_out=b_out.reshape(1, -1).astype(f32),
        w_sig=w_sig.astype(bf),
        b_sig=b_sig.reshape(1, -1).astype(f32),
        w_log=w_log.astype(bf),
        b_log=b_log.reshape(1, -1).astype(f32),
    )


def _const_spec(shape):
    """BlockSpec for a grid-invariant (weight/bias) block: single-buffered so
    the pipeline does not waste VMEM double-buffering data that never changes."""
    index_map = lambda i: (0, 0)
    if _HAS_BUFFERED:
        return pl.BlockSpec(shape, index_map, pipeline_mode=pl.Buffered(1))
    return pl.BlockSpec(shape, index_map)


@functools.partial(jax.jit, static_argnames=("tm", "out_dtype"))
def mixnet_forward(content, spk, lmk, packed, *, tm=512, out_dtype=jnp.bfloat16):
    """tm: batch row tile.  512 fits v5e's 16 MiB scoped-VMEM default; 1024 is a
    good choice on v6e/v7x.  out_dtype=jnp.float32 if the consumer needs f32 outH."""
    B = content.shape[0]
    out_dim = packed["w_out"].shape[1]
    M = packed["w_sig"].shape[1]

    # Tile selection: shrink to the (8-aligned) batch when B is small; for large
    # batches keep >= 2 grid steps so v7x's two TensorCores both get work.
    tm_eff = int(min(tm, _round_up(B, 8)))
    if B >= 256 and pl.cdiv(B, tm_eff) < 2:
        tm_eff = _round_up(pl.cdiv(B, 2), 8)
    grid = (pl.cdiv(B, tm_eff),)   # ragged last block: OOB output rows discarded

    row_spec = lambda d: pl.BlockSpec((tm_eff, d), lambda i: (i, 0))

    in_specs = [
        row_spec(LMK_DIM_CONTENT),            # content (native dtype; cast in-kernel)
        row_spec(LMK_DIM_SPK),                # spk
        row_spec(LMK_DIM),                    # lmk
        _const_spec(packed["w_enc"].shape), _const_spec(packed["b_enc"].shape),
        _const_spec(packed["w_mid_c"].shape), _const_spec(packed["w_mid_s"].shape),
        _const_spec(packed["w_mid_e"].shape), _const_spec(packed["b_mid"].shape),
        _const_spec(packed["w_out"].shape), _const_spec(packed["b_out"].shape),
        _const_spec(packed["w_sig"].shape), _const_spec(packed["b_sig"].shape),
        _const_spec(packed["w_log"].shape), _const_spec(packed["b_log"].shape),
    ]
    out_specs = [row_spec(out_dim), row_spec(M), row_spec(M)]
    out_shape = (jax.ShapeDtypeStruct((B, out_dim), out_dtype),
                 jax.ShapeDtypeStruct((B, M), out_dtype),
                 jax.ShapeDtypeStruct((B, M), out_dtype))

    weight_elems = (LMK_DIM * LMK_DIM_ENC + HIDDEN * HIDDEN
                    + HIDDEN * (out_dim + 2 * M))
    flops = 2 * B * weight_elems
    bytes_accessed = (
        B * (LMK_DIM_CONTENT + LMK_DIM_SPK + LMK_DIM) * content.dtype.itemsize
        + weight_elems * 2                                        # bf16 weights
        + (LMK_DIM_ENC + HIDDEN + out_dim + 2 * M) * 4            # f32 biases
        + B * (out_dim + 2 * M) * jnp.dtype(out_dtype).itemsize)  # outputs

    outH, sigma, logits = pl.pallas_call(
        mixnet_kernel,
        out_shape=out_shape,
        grid_spec=pltpu.PrefetchScalarGridSpec(
            num_scalar_prefetch=0,
            grid=grid,
            in_specs=in_specs,
            out_specs=out_specs,
        ),
        compiler_params=pltpu.CompilerParams(
            dimension_semantics=("parallel",)),   # batch axis shards across TCs (v7x)
        cost_estimate=pl.CostEstimate(
            flops=flops, transcendentals=0, bytes_accessed=bytes_accessed),
    )(content, spk, lmk,
      packed["w_enc"], packed["b_enc"],
      packed["w_mid_c"], packed["w_mid_s"], packed["w_mid_e"], packed["b_mid"],
      packed["w_out"], packed["b_out"],
      packed["w_sig"], packed["b_sig"],
      packed["w_log"], packed["b_log"])
    return outH, sigma, logits


def init_params(key, M):
    """Deterministic kaiming_normal_(mode='fan_out') init: std = sqrt(2 / fan_out)."""
    out_dim = (LMK_DIM + 1 + 2) * M

    def linear(k, fan_in, fan_out):
        std = (2.0 / fan_out) ** 0.5
        w = jax.random.normal(k, (fan_in, fan_out), dtype=jnp.float32) * std
        b = jnp.zeros((fan_out,), dtype=jnp.float32)
        return w, b

    ks = jax.random.split(key, 5)
    w_enc, b_enc = linear(ks[0], LMK_DIM, LMK_DIM_ENC)
    w_mid, b_mid = linear(ks[1], HIDDEN, HIDDEN)
    w_out, b_out = linear(ks[2], HIDDEN, out_dim)
    w_sig, b_sig = linear(ks[3], HIDDEN, M)
    w_log, b_log = linear(ks[4], HIDDEN, M)
    return (w_enc, b_enc, w_mid, b_mid, w_out, b_out,
            w_sig, b_sig, w_log, b_log)


def mixnet_ref(content, spk, lmk, params):
    """Pure-JAX f32 reference mirroring the PyTorch forward (eval mode)."""
    (w_enc, b_enc, w_mid, b_mid, w_out, b_out,
     w_sig, b_sig, w_log, b_log) = params
    lmk_enc = lmk @ w_enc + b_enc
    h = jnp.concatenate([content, spk, lmk_enc], axis=-1)
    h = jnp.maximum(h, 0.0)
    h = h @ w_mid + b_mid
    return (h @ w_out + b_out, h @ w_sig + b_sig, h @ w_log + b_log)


def mixnet_ref_bf16(content, spk, lmk, params):
    """Reference with the same bf16-weight/activation quantization as the kernel."""
    (w_enc, b_enc, w_mid, b_mid, w_out, b_out,
     w_sig, b_sig, w_log, b_log) = params
    bf = jnp.bfloat16
    dot = lambda a, b: jnp.dot(a.astype(bf), b.astype(bf),
                               preferred_element_type=jnp.float32)
    lmk_enc = dot(lmk, w_enc) + b_enc
    c = jnp.maximum(content, 0.0)
    s = jnp.maximum(spk, 0.0)
    e = jnp.maximum(lmk_enc, 0.0)
    x = jnp.concatenate([c, s, e], axis=-1)
    h = dot(x, w_mid) + b_mid
    return dot(h, w_out) + b_out, dot(h, w_sig) + b_sig, dot(h, w_log) + b_log


if __name__ == "__main__":
    M = 8          # number of mixture components
    B = 16         # batch
    key = jax.random.PRNGKey(0)
    k_c, k_s, k_l, k_p = jax.random.split(key, 4)

    content = jax.random.normal(k_c, (B, LMK_DIM_CONTENT), dtype=jnp.float32)
    spk = jax.random.normal(k_s, (B, LMK_DIM_SPK), dtype=jnp.float32)
    lmk = jax.random.normal(k_l, (B, LMK_DIM), dtype=jnp.float32)
    params = init_params(k_p, M)
    packed = pack_params(params)   # one-time packing, outside the per-call path

    outH, sigma, logits = mixnet_forward(content, spk, lmk, packed)
    jax.block_until_ready((outH, sigma, logits))

    out_dim = (LMK_DIM + 1 + 2) * M
    assert outH.shape == (B, out_dim)
    assert sigma.shape == (B, M) and logits.shape == (B, M)

    outH_f = outH.astype(jnp.float32)
    sigma_f = sigma.astype(jnp.float32)
    logits_f = logits.astype(jnp.float32)

    # Tight check against a reference using the same bf16 quantization (f32 accum);
    # tolerance also covers the final bf16 rounding of the kernel outputs.
    outH_q, sigma_q, logits_q = mixnet_ref_bf16(content, spk, lmk, params)
    assert jnp.allclose(outH_f, outH_q, atol=3e-2, rtol=3e-2)
    assert jnp.allclose(sigma_f, sigma_q, atol=3e-2, rtol=3e-2)
    assert jnp.allclose(logits_f, logits_q, atol=3e-2, rtol=3e-2)

    # Loose sanity check against the pure-f32 reference (bf16 quantization noise).
    outH_r, sigma_r, logits_r = mixnet_ref(content, spk, lmk, params)
    assert jnp.allclose(outH_f, outH_r, atol=2e-1, rtol=2e-1)
    assert jnp.allclose(sigma_f, sigma_r, atol=2e-1, rtol=2e-1)
    assert jnp.allclose(logits_f, logits_r, atol=2e-1, rtol=2e-1)

    print("KERNEL_OK")
</pallas_src>

<mosaic_0001>
module attributes {stable_mosaic.version = 11 : i64} {
  func.func @mixnet_kernel(%arg0: i32, %arg1: memref<16x128xf32, #tpu.memory_space<vmem>>, %arg2: memref<16x128xf32, #tpu.memory_space<vmem>>, %arg3: memref<16x136xf32, #tpu.memory_space<vmem>>, %arg4: memref<136x64xbf16, #tpu.memory_space<vmem>>, %arg5: memref<1x64xf32, #tpu.memory_space<vmem>>, %arg6: memref<128x320xbf16, #tpu.memory_space<vmem>>, %arg7: memref<128x320xbf16, #tpu.memory_space<vmem>>, %arg8: memref<64x320xbf16, #tpu.memory_space<vmem>>, %arg9: memref<1x320xf32, #tpu.memory_space<vmem>>, %arg10: memref<320x1112xbf16, #tpu.memory_space<vmem>>, %arg11: memref<1x1112xf32, #tpu.memory_space<vmem>>, %arg12: memref<320x8xbf16, #tpu.memory_space<vmem>>, %arg13: memref<1x8xf32, #tpu.memory_space<vmem>>, %arg14: memref<320x8xbf16, #tpu.memory_space<vmem>>, %arg15: memref<1x8xf32, #tpu.memory_space<vmem>>, %arg16: memref<16x1112xbf16, #tpu.memory_space<vmem>>, %arg17: memref<16x8xbf16, #tpu.memory_space<vmem>>, %arg18: memref<16x8xbf16, #tpu.memory_space<vmem>>) attributes {dimension_semantics = [#tpu.dimension_semantics<parallel>], iteration_bounds = array<i64: 1>, scalar_prefetch = 0 : i64, scratch_operands = 0 : i64, tpu.core_type = #tpu.core_type<tc>, window_params = [{transform_indices = @transform_0, window_bounds = array<i64: 16, 128>}, {transform_indices = @transform_1, window_bounds = array<i64: 16, 128>}, {transform_indices = @transform_2, window_bounds = array<i64: 16, 136>}, {pipeline_mode = #tpu.pipeline_mode<synchronous>, transform_indices = @transform_3, window_bounds = array<i64: 136, 64>}, {pipeline_mode = #tpu.pipeline_mode<synchronous>, transform_indices = @transform_4, window_bounds = array<i64: 1, 64>}, {pipeline_mode = #tpu.pipeline_mode<synchronous>, transform_indices = @transform_5, window_bounds = array<i64: 128, 320>}, {pipeline_mode = #tpu.pipeline_mode<synchronous>, transform_indices = @transform_6, window_bounds = array<i64: 128, 320>}, {pipeline_mode = #tpu.pipeline_mode<synchronous>, transform_indices = @transform_7, window_bounds = array<i64: 64, 320>}, {pipeline_mode = #tpu.pipeline_mode<synchronous>, transform_indices = @transform_8, window_bounds = array<i64: 1, 320>}, {pipeline_mode = #tpu.pipeline_mode<synchronous>, transform_indices = @transform_9, window_bounds = array<i64: 320, 1112>}, {pipeline_mode = #tpu.pipeline_mode<synchronous>, transform_indices = @transform_10, window_bounds = array<i64: 1, 1112>}, {pipeline_mode = #tpu.pipeline_mode<synchronous>, transform_indices = @transform_11, window_bounds = array<i64: 320, 8>}, {pipeline_mode = #tpu.pipeline_mode<synchronous>, transform_indices = @transform_12, window_bounds = array<i64: 1, 8>}, {pipeline_mode = #tpu.pipeline_mode<synchronous>, transform_indices = @transform_13, window_bounds = array<i64: 320, 8>}, {pipeline_mode = #tpu.pipeline_mode<synchronous>, transform_indices = @transform_14, window_bounds = array<i64: 1, 8>}, {transform_indices = @transform_15, window_bounds = array<i64: 16, 1112>}, {transform_indices = @transform_16, window_bounds = array<i64: 16, 8>}, {transform_indices = @transform_17, window_bounds = array<i64: 16, 8>}]} {
    %c0 = arith.constant 0 : index
    %c0_0 = arith.constant 0 : index
    %0 = vector.load %arg3[%c0, %c0_0] : memref<16x136xf32, #tpu.memory_space<vmem>>, vector<16x136xf32>
    %1 = arith.truncf %0 : vector<16x136xf32> to vector<16x136xbf16>
    %c0_1 = arith.constant 0 : index
    %c0_2 = arith.constant 0 : index
    %2 = vector.load %arg4[%c0_1, %c0_2] : memref<136x64xbf16, #tpu.memory_space<vmem>>, vector<136x64xbf16>
    %cst = arith.constant dense<0.000000e+00> : vector<16x64xf32>
    %3 = tpu.matmul %1, %2, %cst {dimension_numbers = #tpu.dot_dimension_numbers<[1], [0], [0], [1], [0, 0, 1, 1], [], []>} : vector<16x136xbf16>, vector<136x64xbf16>, vector<16x64xf32> -> vector<16x64xf32>
    %c0_3 = arith.constant 0 : index
    %c0_4 = arith.constant 0 : index
    %4 = vector.load %arg5[%c0_3, %c0_4] : memref<1x64xf32, #tpu.memory_space<vmem>>, vector<1x64xf32>
    %5 = vector.broadcast %4 : vector<1x64xf32> to vector<16x64xf32>
    %6 = arith.addf %3, %5 : vector<16x64xf32>
    %c0_5 = arith.constant 0 : index
    %c0_6 = arith.constant 0 : index
    %7 = vector.load %arg1[%c0_5, %c0_6] : memref<16x128xf32, #tpu.memory_space<vmem>>, vector<16x128xf32>
    %cst_7 = arith.constant 0.000000e+00 : f32
    %8 = vector.broadcast %cst_7 : f32 to vector<16x128xf32>
    %9 = arith.maximumf %7, %8 : vector<16x128xf32>
    %10 = arith.truncf %9 : vector<16x128xf32> to vector<16x128xbf16>
    %c0_8 = arith.constant 0 : index
    %c0_9 = arith.constant 0 : index
    %11 = vector.load %arg2[%c0_8, %c0_9] : memref<16x128xf32, #tpu.memory_space<vmem>>, vector<16x128xf32>
    %cst_10 = arith.constant 0.000000e+00 : f32
    %12 = vector.broadcast %cst_10 : f32 to vector<16x128xf32>
    %13 = arith.maximumf %11, %12 : vector<16x128xf32>
    %14 = arith.truncf %13 : vector<16x128xf32> to vector<16x128xbf16>
    %cst_11 = arith.constant 0.000000e+00 : f32
    %15 = vector.broadcast %cst_11 : f32 to vector<16x64xf32>
    %16 = arith.maximumf %6, %15 : vector<16x64xf32>
    %17 = arith.truncf %16 : vector<16x64xf32> to vector<16x64xbf16>
    %c0_12 = arith.constant 0 : index
    %c0_13 = arith.constant 0 : index
    %18 = vector.load %arg6[%c0_12, %c0_13] : memref<128x320xbf16, #tpu.memory_space<vmem>>, vector<128x320xbf16>
    %cst_14 = arith.constant dense<0.000000e+00> : vector<16x320xf32>
    %19 = tpu.matmul %10, %18, %cst_14 {dimension_numbers = #tpu.dot_dimension_numbers<[1], [0], [0], [1], [0, 0, 1, 1], [], []>} : vector<16x128xbf16>, vector<128x320xbf16>, vector<16x320xf32> -> vector<16x320xf32>
    %c0_15 = arith.constant 0 : index
    %c0_16 = arith.constant 0 : index
    %20 = vector.load %arg7[%c0_15, %c0_16] : memref<128x320xbf16, #tpu.memory_space<vmem>>, vector<128x320xbf16>
    %cst_17 = arith.constant dense<0.000000e+00> : vector<16x320xf32>
    %21 = tpu.matmul %14, %20, %cst_17 {dimension_numbers = #tpu.dot_dimension_numbers<[1], [0], [0], [1], [0, 0, 1, 1], [], []>} : vector<16x128xbf16>, vector<128x320xbf16>, vector<16x320xf32> -> vector<16x320xf32>
    %22 = arith.addf %19, %21 : vector<16x320xf32>
    %c0_18 = arith.constant 0 : index
    %c0_19 = arith.constant 0 : index
    %23 = vector.load %arg8[%c0_18, %c0_19] : memref<64x320xbf16, #tpu.memory_space<vmem>>, vector<64x320xbf16>
    %cst_20 = arith.constant dense<0.000000e+00> : vector<16x320xf32>
    %24 = tpu.matmul %17, %23, %cst_20 {dimension_numbers = #tpu.dot_dimension_numbers<[1], [0], [0], [1], [0, 0, 1, 1], [], []>} : vector<16x64xbf16>, vector<64x320xbf16>, vector<16x320xf32> -> vector<16x320xf32>
    %25 = arith.addf %22, %24 : vector<16x320xf32>
    %c0_21 = arith.constant 0 : index
    %c0_22 = arith.constant 0 : index
    %26 = vector.load %arg9[%c0_21, %c0_22] : memref<1x320xf32, #tpu.memory_space<vmem>>, vector<1x320xf32>
    %27 = vector.broadcast %26 : vector<1x320xf32> to vector<16x320xf32>
    %28 = arith.addf %25, %27 : vector<16x320xf32>
    %29 = arith.truncf %28 : vector<16x320xf32> to vector<16x320xbf16>
    %c0_23 = arith.constant 0 : index
    %c0_24 = arith.constant 0 : index
    %30 = vector.load %arg10[%c0_23, %c0_24] : memref<320x1112xbf16, #tpu.memory_space<vmem>>, vector<320x1112xbf16>
    %cst_25 = arith.constant dense<0.000000e+00> : vector<16x1112xf32>
    %31 = tpu.matmul %29, %30, %cst_25 {dimension_numbers = #tpu.dot_dimension_numbers<[1], [0], [0], [1], [0, 0, 1, 1], [], []>} : vector<16x320xbf16>, vector<320x1112xbf16>, vector<16x1112xf32> -> vector<16x1112xf32>
    %c0_26 = arith.constant 0 : index
    %c0_27 = arith.constant 0 : index
    %32 = vector.load %arg11[%c0_26, %c0_27] : memref<1x1112xf32, #tpu.memory_space<vmem>>, vector<1x1112xf32>
    %33 = vector.broadcast %32 : vector<1x1112xf32> to vector<16x1112xf32>
    %34 = arith.addf %31, %33 : vector<16x1112xf32>
    %35 = arith.truncf %34 : vector<16x1112xf32> to vector<16x1112xbf16>
    %c0_28 = arith.constant 0 : index
    %c0_29 = arith.constant 0 : index
    %36 = vector.load %arg16[%c0_28, %c0_29] : memref<16x1112xbf16, #tpu.memory_space<vmem>>, vector<16x1112xbf16>
    tpu.vector_store %arg16[%c0_28, %c0_29], %35 {strides = array<i32>} : memref<16x1112xbf16, #tpu.memory_space<vmem>>, vector<16x1112xbf16>,
    %c0_30 = arith.constant 0 : index
    %c0_31 = arith.constant 0 : index
    %37 = vector.load %arg12[%c0_30, %c0_31] : memref<320x8xbf16, #tpu.memory_space<vmem>>, vector<320x8xbf16>
    %cst_32 = arith.constant dense<0.000000e+00> : vector<16x8xf32>
    %38 = tpu.matmul %29, %37, %cst_32 {dimension_numbers = #tpu.dot_dimension_numbers<[1], [0], [0], [1], [0, 0, 1, 1], [], []>} : vector<16x320xbf16>, vector<320x8xbf16>, vector<16x8xf32> -> vector<16x8xf32>
    %c0_33 = arith.constant 0 : index
    %c0_34 = arith.constant 0 : index
    %39 = vector.load %arg13[%c0_33, %c0_34] : memref<1x8xf32, #tpu.memory_space<vmem>>, vector<1x8xf32>
    %40 = vector.broadcast %39 : vector<1x8xf32> to vector<16x8xf32>
    %41 = arith.addf %38, %40 : vector<16x8xf32>
    %42 = arith.truncf %41 : vector<16x8xf32> to vector<16x8xbf16>
    %c0_35 = arith.constant 0 : index
    %c0_36 = arith.constant 0 : index
    %43 = vector.load %arg17[%c0_35, %c0_36] : memref<16x8xbf16, #tpu.memory_space<vmem>>, vector<16x8xbf16>
    tpu.vector_store %arg17[%c0_35, %c0_36], %42 {strides = array<i32>} : memref<16x8xbf16, #tpu.memory_space<vmem>>, vector<16x8xbf16>,
    %c0_37 = arith.constant 0 : index
    %c0_38 = arith.constant 0 : index
    %44 = vector.load %arg14[%c0_37, %c0_38] : memref<320x8xbf16, #tpu.memory_space<vmem>>, vector<320x8xbf16>
    %cst_39 = arith.constant dense<0.000000e+00> : vector<16x8xf32>
    %45 = tpu.matmul %29, %44, %cst_39 {dimension_numbers = #tpu.dot_dimension_numbers<[1], [0], [0], [1], [0, 0, 1, 1], [], []>} : vector<16x320xbf16>, vector<320x8xbf16>, vector<16x8xf32> -> vector<16x8xf32>
    %c0_40 = arith.constant 0 : index
    %c0_41 = arith.constant 0 : index
    %46 = vector.load %arg15[%c0_40, %c0_41] : memref<1x8xf32, #tpu.memory_space<vmem>>, vector<1x8xf32>
    %47 = vector.broadcast %46 : vector<1x8xf32> to vector<16x8xf32>
    %48 = arith.addf %45, %47 : vector<16x8xf32>
    %49 = arith.truncf %48 : vector<16x8xf32> to vector<16x8xbf16>
    %c0_42 = arith.constant 0 : index
    %c0_43 = arith.constant 0 : index
    %50 = vector.load %arg18[%c0_42, %c0_43] : memref<16x8xbf16, #tpu.memory_space<vmem>>, vector<16x8xbf16>
    tpu.vector_store %arg18[%c0_42, %c0_43], %49 {strides = array<i32>} : memref<16x8xbf16, #tpu.memory_space<vmem>>, vector<16x8xbf16>,
    return
  }
  func.func @transform_0(%arg0: i32) -> (i32, i32) {
    %c0_i32 = arith.constant 0 : i32
    %c0_i32_0 = arith.constant 0 : i32
    return %arg0, %c0_i32 : i32, i32
  }
  func.func @transform_1(%arg0: i32) -> (i32, i32) {
    %c0_i32 = arith.constant 0 : i32
    %c0_i32_0 = arith.constant 0 : i32
    return %arg0, %c0_i32 : i32, i32
  }
  func.func @transform_2(%arg0: i32) -> (i32, i32) {
    %c0_i32 = arith.constant 0 : i32
    %c0_i32_0 = arith.constant 0 : i32
    return %arg0, %c0_i32 : i32, i32
  }
  func.func @transform_3(%arg0: i32) -> (i32, i32) {
    %c0_i32 = arith.constant 0 : i32
    %c0_i32_0 = arith.constant 0 : i32
    %c0_i32_1 = arith.constant 0 : i32
    return %c0_i32, %c0_i32_0 : i32, i32
  }
  func.func @transform_4(%arg0: i32) -> (i32, i32) {
    %c0_i32 = arith.constant 0 : i32
    %c0_i32_0 = arith.constant 0 : i32
    %c0_i32_1 = arith.constant 0 : i32
    return %c0_i32, %c0_i32_0 : i32, i32
  }
  func.func @transform_5(%arg0: i32) -> (i32, i32) {
    %c0_i32 = arith.constant 0 : i32
    %c0_i32_0 = arith.constant 0 : i32
    %c0_i32_1 = arith.constant 0 : i32
    return %c0_i32, %c0_i32_0 : i32, i32
  }
  func.func @transform_6(%arg0: i32) -> (i32, i32) {
    %c0_i32 = arith.constant 0 : i32
    %c0_i32_0 = arith.constant 0 : i32
    %c0_i32_1 = arith.constant 0 : i32
    return %c0_i32, %c0_i32_0 : i32, i32
  }
  func.func @transform_7(%arg0: i32) -> (i32, i32) {
    %c0_i32 = arith.constant 0 : i32
    %c0_i32_0 = arith.constant 0 : i32
    %c0_i32_1 = arith.constant 0 : i32
    return %c0_i32, %c0_i32_0 : i32, i32
  }
  func.func @transform_8(%arg0: i32) -> (i32, i32) {
    %c0_i32 = arith.constant 0 : i32
    %c0_i32_0 = arith.constant 0 : i32
    %c0_i32_1 = arith.constant 0 : i32
    return %c0_i32, %c0_i32_0 : i32, i32
  }
  func.func @transform_9(%arg0: i32) -> (i32, i32) {
    %c0_i32 = arith.constant 0 : i32
    %c0_i32_0 = arith.constant 0 : i32
    %c0_i32_1 = arith.constant 0 : i32
    return %c0_i32, %c0_i32_0 : i32, i32
  }
  func.func @transform_10(%arg0: i32) -> (i32, i32) {
    %c0_i32 = arith.constant 0 : i32
    %c0_i32_0 = arith.constant 0 : i32
    %c0_i32_1 = arith.constant 0 : i32
    return %c0_i32, %c0_i32_0 : i32, i32
  }
  func.func @transform_11(%arg0: i32) -> (i32, i32) {
    %c0_i32 = arith.constant 0 : i32
    %c0_i32_0 = arith.constant 0 : i32
    %c0_i32_1 = arith.constant 0 : i32
    return %c0_i32, %c0_i32_0 : i32, i32
  }
  func.func @transform_12(%arg0: i32) -> (i32, i32) {
    %c0_i32 = arith.constant 0 : i32
    %c0_i32_0 = arith.constant 0 : i32
    %c0_i32_1 = arith.constant 0 : i32
    return %c0_i32, %c0_i32_0 : i32, i32
  }
  func.func @transform_13(%arg0: i32) -> (i32, i32) {
    %c0_i32 = arith.constant 0 : i32
    %c0_i32_0 = arith.constant 0 : i32
    %c0_i32_1 = arith.constant 0 : i32
    return %c0_i32, %c0_i32_0 : i32, i32
  }
  func.func @transform_14(%arg0: i32) -> (i32, i32) {
    %c0_i32 = arith.constant 0 : i32
    %c0_i32_0 = arith.constant 0 : i32
    %c0_i32_1 = arith.constant 0 : i32
    return %c0_i32, %c0_i32_0 : i32, i32
  }
  func.func @transform_15(%arg0: i32) -> (i32, i32) {
    %c0_i32 = arith.constant 0 : i32
    %c0_i32_0 = arith.constant 0 : i32
    return %arg0, %c0_i32 : i32, i32
  }
  func.func @transform_16(%arg0: i32) -> (i32, i32) {
    %c0_i32 = arith.constant 0 : i32
    %c0_i32_0 = arith.constant 0 : i32
    return %arg0, %c0_i32 : i32, i32
  }
  func.func @transform_17(%arg0: i32) -> (i32, i32) {
    %c0_i32 = arith.constant 0 : i32
    %c0_i32_0 = arith.constant 0 : i32
    return %arg0, %c0_i32 : i32, i32
  }
}

</mosaic_0001>

<llo_original>
// kernel: mixnet_forward.1
$region0: #{mixnet_forward.1}
  #allocation0 [shape = 'u32[]', space=smem, size = 0x4, offset = 0x4, fixed_abs, tag = 'smem constant byte address 0x4 - core index']
  #allocation1 [shape = 'u32[72,128]{1,0:T(1,128)}', space=vmem, size = 0x9000, scoped, tag = 'internal scratch']
  %s0 = inlined_call_operand.vmem [shape: f32[16,128], index: 0, kind: input, shape index: {}]
  %s1 = inlined_call_operand.vmem [shape: f32[16,128], index: 1, kind: input, shape index: {}]
  %s2 = inlined_call_operand.vmem [shape: f32[16,136], index: 2, kind: input, shape index: {}]
  %s3 = inlined_call_operand.vmem [shape: bf16[136,64], index: 3, kind: input, shape index: {}]
  %s4 = inlined_call_operand.vmem [shape: f32[1,64], index: 4, kind: input, shape index: {}]
  %s5 = inlined_call_operand.vmem [shape: bf16[128,320], index: 5, kind: input, shape index: {}]
  %s6 = inlined_call_operand.vmem [shape: bf16[128,320], index: 6, kind: input, shape index: {}]
  %s7 = inlined_call_operand.vmem [shape: bf16[64,320], index: 7, kind: input, shape index: {}]
  %s8 = inlined_call_operand.vmem [shape: f32[1,320], index: 8, kind: input, shape index: {}]
  %s9 = inlined_call_operand.hbm [shape: bf16[320,1112], index: 9, kind: input, shape index: {}]
  %s10 = inlined_call_operand.vmem [shape: f32[1,1112], index: 10, kind: input, shape index: {}]
  %s11 = inlined_call_operand.vmem [shape: bf16[320,8], index: 11, kind: input, shape index: {}]
  %s12 = inlined_call_operand.vmem [shape: f32[1,8], index: 12, kind: input, shape index: {}]
  %s13 = inlined_call_operand.vmem [shape: bf16[320,8], index: 13, kind: input, shape index: {}]
  %s14 = inlined_call_operand.vmem [shape: f32[1,8], index: 14, kind: input, shape index: {}]
  %s15 = inlined_call_operand.hbm [shape: bf16[16,1112], index: 15, kind: output, shape index: {0}]
  %s16 = inlined_call_operand.vmem [shape: bf16[16,8], index: 16, kind: output, shape index: {1}]
  %s17 = inlined_call_operand.vmem [shape: bf16[16,8], index: 17, kind: output, shape index: {2}]
  %18 = xla_tuple %s15, %s16, %s17
  %s19 = sld [smem:[#allocation0]]
  $region90: #{mixnet_forward.1} parent=0
    _
  %s21 = ssub.s32 1, %s19
  %s22 = scalar_select 0, %s21, %s19
  $region1: #{mixnet_forward.1} parent=0
    #allocation2 [shape = 'u8[737280]{0}', space=vmem, size = 0xb4000, scoped, tag = 'input window, operand 9, single buffered']
    #allocation3 [shape = 's32[1]{0}', space=sflag, size = 0x4, scoped, tag = 'scoped memory for mixnet_forward.1']
    #allocation4 [shape = 's32[1]{0}', space=sflag, size = 0x4, scoped, tag = 'scoped memory for mixnet_forward.1']
    #allocation5 [shape = 'u8[36864]{0}', space=vmem, size = 0x9000, scoped, tag = 'output window, operand 0, single buffered']
    %23 = vsyncpa [#allocation3], 0
    %24 = vsyncpa [#allocation4], 0
    // Predicated region
    $region2: #{mixnet_forward.1} parent=1 // pred_check
      _
    $region3: #{mixnet_forward.1} parent=1 // pred_check_branch
      %26 = sbr.rel (0) target = $region5
    $region4: #{mixnet_forward.1} parent=1 // pred_region
      _
    $region5: #{mixnet_forward.1} parent=1 // pred_fallthru
      _
    // Predicated region
    $region6: #{mixnet_forward.1} parent=1 // pred_check
      _
    $region7: #{mixnet_forward.1} parent=1 // pred_check_branch
      %28 = sbr.rel (0) target = $region9
    $region8: #{mixnet_forward.1} parent=1 // pred_region
      _
    $region9: #{mixnet_forward.1} parent=1 // pred_fallthru
      _
    // Predicated region
    $region10: #{mixnet_forward.1} parent=1 // pred_check
      _
    $region11: #{mixnet_forward.1} parent=1 // pred_check_branch
      %30 = sbr.rel (0) target = $region13
    $region12: #{mixnet_forward.1} parent=1 // pred_region
      _
    $region13: #{mixnet_forward.1} parent=1 // pred_fallthru
      _
    // Predicated region
    $region14: #{mixnet_forward.1} parent=1 // pred_check
      _
    $region15: #{mixnet_forward.1} parent=1 // pred_check_branch
      %32 = sbr.rel (0) target = $region17
    $region16: #{mixnet_forward.1} parent=1 // pred_region
      _
    $region17: #{mixnet_forward.1} parent=1 // pred_fallthru
      _
    // Predicated region
    $region18: #{mixnet_forward.1} parent=1 // pred_check
      _
    $region19: #{mixnet_forward.1} parent=1 // pred_check_branch
      %34 = sbr.rel (0) target = $region21
    $region20: #{mixnet_forward.1} parent=1 // pred_region
      _
    $region21: #{mixnet_forward.1} parent=1 // pred_fallthru
      _
    // Predicated region
    $region22: #{mixnet_forward.1} parent=1 // pred_check
      _
    $region23: #{mixnet_forward.1} parent=1 // pred_check_branch
      %36 = sbr.rel (0) target = $region25
    $region24: #{mixnet_forward.1} parent=1 // pred_region
      _
    $region25: #{mixnet_forward.1} parent=1 // pred_fallthru
      _
    // Predicated region
    $region26: #{mixnet_forward.1} parent=1 // pred_check
      _
    $region27: #{mixnet_forward.1} parent=1 // pred_check_branch
      %38 = sbr.rel (0) target = $region29
    $region28: #{mixnet_forward.1} parent=1 // pred_region
      _
    $region29: #{mixnet_forward.1} parent=1 // pred_fallthru
      _
    // Predicated region
    $region30: #{mixnet_forward.1} parent=1 // pred_check
      _
    $region31: #{mixnet_forward.1} parent=1 // pred_check_branch
      %40 = sbr.rel (0) target = $region33
    $region32: #{mixnet_forward.1} parent=1 // pred_region
      _
    $region33: #{mixnet_forward.1} parent=1 // pred_fallthru
      _
    // Predicated region
    $region34: #{mixnet_forward.1} parent=1 // pred_check
      _
    $region35: #{mixnet_forward.1} parent=1 // pred_check_branch
      %42 = sbr.rel (0) target = $region37
    $region36: #{mixnet_forward.1} parent=1 // pred_region
      _
    $region37: #{mixnet_forward.1} parent=1 // pred_fallthru
      _
    // Predicated region
    $region38: #{mixnet_forward.1} parent=1 // pred_check
      _
    $region39: #{mixnet_forward.1} parent=1 // pred_check_branch
      %44 = sbr.rel (0) target = $region41
    $region40: #{mixnet_forward.1} parent=1 // pred_region
      %46 = vsyncadd [#allocation3], 0
      %s47 = sshll.u32 %s9, 4
      %s48 = int_to_ptr.hbm [resolvable:$true] %s47
      %s49 = sshll.u32 [#allocation2], 4
      %s50 = int_to_ptr.vmem [resolvable:$true] %s49
      %55 = dma.hbm_to_vmem [thread:$0]  %s48, 23040, %s50, [#allocation3], 576, 576, 36
    $region41: #{mixnet_forward.1} parent=1 // pred_fallthru
      _
    // Predicated region
    $region42: #{mixnet_forward.1} parent=1 // pred_check
      _
    $region43: #{mixnet_forward.1} parent=1 // pred_check_branch
      %57 = sbr.rel (0) target = $region45
    $region44: #{mixnet_forward.1} parent=1 // pred_region
      _
    $region45: #{mixnet_forward.1} parent=1 // pred_fallthru
      _
    // Predicated region
    $region46: #{mixnet_forward.1} parent=1 // pred_check
      _
    $region47: #{mixnet_forward.1} parent=1 // pred_check_branch
      %59 = sbr.rel (0) target = $region49
    $region48: #{mixnet_forward.1} parent=1 // pred_region
      _
    $region49: #{mixnet_forward.1} parent=1 // pred_fallthru
      _
    // Predicated region
    $region50: #{mixnet_forward.1} parent=1 // pred_check
      _
    $region51: #{mixnet_forward.1} parent=1 // pred_check_branch
      %61 = sbr.rel (0) target = $region53
    $region52: #{mixnet_forward.1} parent=1 // pred_region
      _
    $region53: #{mixnet_forward.1} parent=1 // pred_fallthru
      _
    // Predicated region
    $region54: #{mixnet_forward.1} parent=1 // pred_check
      _
    $region55: #{mixnet_forward.1} parent=1 // pred_check_branch
      %63 = sbr.rel (0) target = $region57
    $region56: #{mixnet_forward.1} parent=1 // pred_region
      _
    $region57: #{mixnet_forward.1} parent=1 // pred_fallthru
      _
    // Predicated region
    $region58: #{mixnet_forward.1} parent=1 // pred_check
      _
    $region59: #{mixnet_forward.1} parent=1 // pred_check_branch
      %65 = sbr.rel (0) target = $region61
    $region60: #{mixnet_forward.1} parent=1 // pred_region
      _
    $region61: #{mixnet_forward.1} parent=1 // pred_fallthru
      _
    // Predicated region
    $region62: #{mixnet_forward.1} parent=1 // pred_check
      _
    $region63: #{mixnet_forward.1} parent=1 // pred_check_branch
      %67 = sbr.rel (0) target = $region65
    $region64: #{mixnet_forward.1} parent=1 // pred_region
      %69 = dma.done [#allocation3], 23040
    $region65: #{mixnet_forward.1} parent=1 // pred_fallthru
      _
    %v71 = vld [vmem:[%s2] sm:$0xff]
    %v72 = vld [vmem:[%s2 + $0x8] sm:$0xff]
    %v73 = vld [vmem:[%s2 + $0x10] sm:$0xff]
    %v74 = vld [vmem:[%s2 + $0x18] sm:$0xff]
    %v75 = vpack.c.bf16 %v73, %v71
    %v76 = vpack.c.bf16 %v74, %v72
    %v77 = vld [vmem:[%s3] sm:$0xf]
    %v78 = vld [vmem:[%s3 + $0x4] sm:$0xf]
    %v79 = vld [vmem:[%s3 + $0x8] sm:$0xf]
    %v80 = vld [vmem:[%s3 + $0xc] sm:$0xf]
    %v81 = vld [vmem:[%s3 + $0x10] sm:$0xf]
    %v82 = vld [vmem:[%s3 + $0x14] sm:$0xf]
    %v83 = vld [vmem:[%s3 + $0x18] sm:$0xf]
    %v84 = vld [vmem:[%s3 + $0x1c] sm:$0xf]
    %v85 = vld [vmem:[%s3 + $0x20] sm:$0xf]
    %v86 = vld [vmem:[%s3 + $0x24] sm:$0xf]
    %v87 = vld [vmem:[%s3 + $0x28] sm:$0xf]
    %v88 = vld [vmem:[%s3 + $0x2c] sm:$0xf]
    %v89 = vld [vmem:[%s3 + $0x30] sm:$0xf]
    %v90 = vld [vmem:[%s3 + $0x34] sm:$0xf]
    %v91 = vld [vmem:[%s3 + $0x38] sm:$0xf]
    %v92 = vld [vmem:[%s3 + $0x3c] sm:$0xf]
    %v93 = vld [vmem:[%s3 + $0x40] sm:$0xf]
    %v94 = vld [vmem:[%s4] sm:$0x1]
    %v96 = vperm.slane %v94, 0
    %v115 = vunpack.c.l.b16 %v77
    %v116 = vunpack.c.l.b16 %v78
    %v117 = vunpack.c.l.b16 %v79
    %v118 = vunpack.c.l.b16 %v80
    %v119 = vunpack.c.l.b16 %v81
    %v120 = vunpack.c.l.b16 %v82
    %v121 = vunpack.c.l.b16 %v83
    %v122 = vunpack.c.l.b16 %v84
    %v123 = vunpack.c.l.b16 %v85
    %v124 = vunpack.c.l.b16 %v86
    %v125 = vunpack.c.l.b16 %v87
    %v126 = vunpack.c.l.b16 %v88
    %v127 = vunpack.c.l.b16 %v89
    %v128 = vunpack.c.l.b16 %v90
    %v129 = vunpack.c.l.b16 %v91
    %v130 = vunpack.c.l.b16 %v92
    %v131 = vunpack.c.l.b16 %v93
    %v132 = vpack.c.b16 %v116, %v115
    %v133 = vpack.c.b16 %v118, %v117
    %v134 = vpack.c.b16 %v120, %v119
    %v135 = vpack.c.b16 %v122, %v121
    %v136 = vpack.c.b16 %v124, %v123
    %v137 = vpack.c.b16 %v126, %v125
    %v138 = vpack.c.b16 %v128, %v127
    %v139 = vpack.c.b16 %v130, %v129
    %v140 = vpack.c.b16 %v131, %v131
    %vm149 = vcmask 64512
    %v151 = vsel %vm149, %v76, 0
    %vm153 = vcmask 1043456
    %v155 = vsel %vm153, %v140, 0
    %157 = vmatpush.bf16.msra.mxu0 %v139
    %158 = vmatpush.bf16.msra.mxu0 %v138
    %159 = vmatpush.bf16.msra.mxu0 %v137
    %160 = vmatpush.bf16.msra.mxu0 %v136
    %161 = vmatpush.bf16.msra.mxu0 %v135
    %162 = vmatpush.bf16.msra.mxu0 %v134
    %163 = vmatpush.bf16.msra.mxu0 %v133
    %164 = vmatpush.bf16.msra.mxu0 %v132
    %165 = vmatmul.bf16.gmra.mxu0 %v75
    %v166 = vpop.f32.mrf.mxu0
    %v167 = vadd.f32 %v96, %v166
    %v168 = vpop.f32.mrf.mxu0
    %v169 = vadd.f32 %v96, %v168
    %170 = vdwg.mxu0
    %171 = vmatpush.bf16.msra.mxu0 0
    %172 = vmatpush.bf16.msra.mxu0 0
    %173 = vmatpush.bf16.msra.mxu0 0
    %174 = vmatpush.bf16.msra.mxu0 0
    %175 = vmatpush.bf16.msra.mxu0 0
    %176 = vmatpush.bf16.msra.mxu0 0
    %177 = vmatpush.bf16.msra.mxu0 0
    %178 = vmatpush.bf16.msra.mxu0 %v155
    %179 = vmatmul.bf16.gmra.mxu0 %v151
    %v180 = vpop.f32.mrf.mxu0
    %v181 = vadd.f32 %v167, %v180
    %v182 = vpop.f32.mrf.mxu0
    %v183 = vadd.f32 %v169, %v182
    %184 = vdwg.mxu0
    %v185 = vld [vmem:[%s0] sm:$0xff]
    %v186 = vld [vmem:[%s0 + $0x8] sm:$0xff]
    %v187 = vmax.f32 %v185, 0.0
    %v188 = vmax.f32 %v186, 0.0
    %v189 = vpack.c.bf16 %v188, %v187
    %v190 = vld [vmem:[%s1] sm:$0xff]
    %v191 = vld [vmem:[%s1 + $0x8] sm:$0xff]
    %v192 = vmax.f32 %v190, 0.0
    %v193 = vmax.f32 %v191, 0.0
    %v194 = vpack.c.bf16 %v193, %v192
    %v195 = vmax.f32 %v181, 0.0
    %v196 = vmax.f32 %v183, 0.0
    %v197 = vpack.c.bf16 %v196, %v195
    %v198 = vld [vmem:[%s5] sm:$0xff]
    %v199 = vld [vmem:[%s5 + $0x8] sm:$0xf]
    %v200 = vld [vmem:[%s5 + $0xc] sm:$0xff]
    %v201 = vld [vmem:[%s5 + $0x14] sm:$0xf]
    %v202 = vld [vmem:[%s5 + $0x18] sm:$0xff]
    %v203 = vld [vmem:[%s5 + $0x20] sm:$0xf]
    %v204 = vld [vmem:[%s5 + $0x24] sm:$0xff]
    %v205 = vld [vmem:[%s5 + $0x2c] sm:$0xf]
    %v206 = vld [vmem:[%s5 + $0x30] sm:$0xff]
    %v207 = vld [vmem:[%s5 + $0x38] sm:$0xf]
    %v208 = vld [vmem:[%s5 + $0x3c] sm:$0xff]
    %v209 = vld [vmem:[%s5 + $0x44] sm:$0xf]
    %v210 = vld [vmem:[%s5 + $0x48] sm:$0xff]
    %v211 = vld [vmem:[%s5 + $0x50] sm:$0xf]
    %v212 = vld [vmem:[%s5 + $0x54] sm:$0xff]
    %v213 = vld [vmem:[%s5 + $0x5c] sm:$0xf]
    %v214 = vld [vmem:[%s5 + $0x60] sm:$0xff]
    %v215 = vld [vmem:[%s5 + $0x68] sm:$0xf]
    %v216 = vld [vmem:[%s5 + $0x6c] sm:$0xff]
    %v217 = vld [vmem:[%s5 + $0x74] sm:$0xf]
    %v218 = vld [vmem:[%s5 + $0x78] sm:$0xff]
    %v219 = vld [vmem:[%s5 + $0x80] sm:$0xf]
    %v220 = vld [vmem:[%s5 + $0x84] sm:$0xff]
    %v221 = vld [vmem:[%s5 + $0x8c] sm:$0xf]
    %v222 = vld [vmem:[%s5 + $0x90] sm:$0xff]
    %v223 = vld [vmem:[%s5 + $0x98] sm:$0xf]
    %v224 = vld [vmem:[%s5 + $0x9c] sm:$0xff]
    %v225 = vld [vmem:[%s5 + $0xa4] sm:$0xf]
    %v226 = vld [vmem:[%s5 + $0xa8] sm:$0xff]
    %v227 = vld [vmem:[%s5 + $0xb0] sm:$0xf]
    %v228 = vld [vmem:[%s5 + $0xb4] sm:$0xff]
    %v229 = vld [vmem:[%s5 + $0xbc] sm:$0xf]
    %v230 = vld [vmem:[%s6] sm:$0xff]
    %v231 = vld [vmem:[%s6 + $0x8] sm:$0xf]
    %v232 = vld [vmem:[%s6 + $0xc] sm:$0xff]
    %v233 = vld [vmem:[%s6 + $0x14] sm:$0xf]
    %v234 = vld [vmem:[%s6 + $0x18] sm:$0xff]
    %v235 = vld [vmem:[%s6 + $0x20] sm:$0xf]
    %v236 = vld [vmem:[%s6 + $0x24] sm:$0xff]
    %v237 = vld [vmem:[%s6 + $0x2c] sm:$0xf]
    %v238 = vld [vmem:[%s6 + $0x30] sm:$0xff]
    %v239 = vld [vmem:[%s6 + $0x38] sm:$0xf]
    %v240 = vld [vmem:[%s6 + $0x3c] sm:$0xff]
    %v241 = vld [vmem:[%s6 + $0x44] sm:$0xf]
    %v242 = vld [vmem:[%s6 + $0x48] sm:$0xff]
    %v243 = vld [vmem:[%s6 + $0x50] sm:$0xf]
    %v244 = vld [vmem:[%s6 + $0x54] sm:$0xff]
    %v245 = vld [vmem:[%s6 + $0x5c] sm:$0xf]
    %v246 = vld [vmem:[%s6 + $0x60] sm:$0xff]
    %v247 = vld [vmem:[%s6 + $0x68] sm:$0xf]
    %v248 = vld [vmem:[%s6 + $0x6c] sm:$0xff]
    %v249 = vld [vmem:[%s6 + $0x74] sm:$0xf]
    %v250 = vld [vmem:[%s6 + $0x78] sm:$0xff]
    %v251 = vld [vmem:[%s6 + $0x80] sm:$0xf]
    %v252 = vld [vmem:[%s6 + $0x84] sm:$0xff]
    %v253 = vld [vmem:[%s6 + $0x8c] sm:$0xf]
    %v254 = vld [vmem:[%s6 + $0x90] sm:$0xff]
    %v255 = vld [vmem:[%s6 + $0x98] sm:$0xf]
    %v256 = vld [vmem:[%s6 + $0x9c] sm:$0xff]
    %v257 = vld [vmem:[%s6 + $0xa4] sm:$0xf]
    %v258 = vld [vmem:[%s6 + $0xa8] sm:$0xff]
    %v259 = vld [vmem:[%s6 + $0xb0] sm:$0xf]
    %v260 = vld [vmem:[%s6 + $0xb4] sm:$0xff]
    %v261 = vld [vmem:[%s6 + $0xbc] sm:$0xf]
    %v294 = vunpack.c.l.b16 %v230
    %v295 = vunpack.c.h.b16 %v230
    %v296 = vunpack.c.l.b16 %v231
    %v297 = vunpack.c.l.b16 %v232
    %v298 = vunpack.c.h.b16 %v232
    %v299 = vunpack.c.l.b16 %v233
    %v300 = vunpack.c.l.b16 %v234
    %v301 = vunpack.c.h.b16 %v234
    %v302 = vunpack.c.l.b16 %v235
    %v303 = vunpack.c.l.b16 %v236
    %v304 = vunpack.c.h.b16 %v236
    %v305 = vunpack.c.l.b16 %v237
    %v306 = vunpack.c.l.b16 %v238
    %v307 = vunpack.c.h.b16 %v238
    %v308 = vunpack.c.l.b16 %v239
    %v309 = vunpack.c.l.b16 %v240
    %v310 = vunpack.c.h.b16 %v240
    %v311 = vunpack.c.l.b16 %v241
    %v312 = vunpack.c.l.b16 %v242
    %v313 = vunpack.c.h.b16 %v242
    %v314 = vunpack.c.l.b16 %v243
    %v315 = vunpack.c.l.b16 %v244
    %v316 = vunpack.c.h.b16 %v244
    %v317 = vunpack.c.l.b16 %v245
    %v318 = vunpack.c.l.b16 %v246
    %v319 = vunpack.c.h.b16 %v246
    %v320 = vunpack.c.l.b16 %v247
    %v321 = vunpack.c.l.b16 %v248
    %v322 = vunpack.c.h.b16 %v248
    %v323 = vunpack.c.l.b16 %v249
    %v324 = vunpack.c.l.b16 %v250
    %v325 = vunpack.c.h.b16 %v250
    %v326 = vunpack.c.l.b16 %v251
    %v327 = vunpack.c.l.b16 %v252
    %v328 = vunpack.c.h.b16 %v252
    %v329 = vunpack.c.l.b16 %v253
    %v330 = vunpack.c.l.b16 %v254
    %v331 = vunpack.c.h.b16 %v254
    %v332 = vunpack.c.l.b16 %v255
    %v333 = vunpack.c.l.b16 %v256
    %v334 = vunpack.c.h.b16 %v256
    %v335 = vunpack.c.l.b16 %v257
    %v336 = vunpack.c.l.b16 %v258
    %v337 = vunpack.c.h.b16 %v258
    %v338 = vunpack.c.l.b16 %v259
    %v339 = vunpack.c.l.b16 %v260
    %v340 = vunpack.c.h.b16 %v260
    %v341 = vunpack.c.l.b16 %v261
    %v342 = vpack.c.b16 %v297, %v294
    %v343 = vpack.c.b16 %v298, %v295
    %v344 = vpack.c.b16 %v299, %v296
    %v345 = vpack.c.b16 %v303, %v300
    %v346 = vpack.c.b16 %v304, %v301
    %v347 = vpack.c.b16 %v305, %v302
    %v348 = vpack.c.b16 %v309, %v306
    %v349 = vpack.c.b16 %v310, %v307
    %v350 = vpack.c.b16 %v311, %v308
    %v351 = vpack.c.b16 %v315, %v312
    %v352 = vpack.c.b16 %v316, %v313
    %v353 = vpack.c.b16 %v317, %v314
    %v354 = vpack.c.b16 %v321, %v318
    %v355 = vpack.c.b16 %v322, %v319
    %v356 = vpack.c.b16 %v323, %v320
    %v357 = vpack.c.b16 %v327, %v324
    %v358 = vpack.c.b16 %v328, %v325
    %v359 = vpack.c.b16 %v329, %v326
    %v360 = vpack.c.b16 %v333, %v330
    %v361 = vpack.c.b16 %v334, %v331
    %v362 = vpack.c.b16 %v335, %v332
    %v363 = vpack.c.b16 %v339, %v336
    %v364 = vpack.c.b16 %v340, %v337
    %v365 = vpack.c.b16 %v341, %v338
    %390 = vmatpush.bf16.msra.mxu0 %v363
    %391 = vmatpush.bf16.msra.mxu0 %v360
    %392 = vmatpush.bf16.msra.mxu0 %v357
    %393 = vmatpush.bf16.msra.mxu0 %v354
    %394 = vmatpush.bf16.msra.mxu0 %v351
    %395 = vmatpush.bf16.msra.mxu0 %v348
    %396 = vmatpush.bf16.msra.mxu0 %v345
    %397 = vmatpush.bf16.msra.mxu0 %v342
    %398 = vmatmul.bf16.gmra.mxu0 %v194
    %v399 = vpop.f32.mrf.mxu0
    %v400 = vadd.f32 0.0, %v399
    %v401 = vpop.f32.mrf.mxu0
    %v402 = vadd.f32 0.0, %v401
    %403 = vdwg.mxu0
    %404 = vmatpush.bf16.msra.mxu0 %v364
    %405 = vmatpush.bf16.msra.mxu0 %v361
    %406 = vmatpush.bf16.msra.mxu0 %v358
    %407 = vmatpush.bf16.msra.mxu0 %v355
    %408 = vmatpush.bf16.msra.mxu0 %v352
    %409 = vmatpush.bf16.msra.mxu0 %v349
    %410 = vmatpush.bf16.msra.mxu0 %v346
    %411 = vmatpush.bf16.msra.mxu0 %v343
    %412 = vmatmul.bf16.gmra.mxu0 %v194
    %v413 = vpop.f32.mrf.mxu0
    %v414 = vadd.f32 0.0, %v413
    %v415 = vpop.f32.mrf.mxu0
    %v416 = vadd.f32 0.0, %v415
    %417 = vdwg.mxu0
    %418 = vmatpush.bf16.msra.mxu0 %v365
    %419 = vmatpush.bf16.msra.mxu0 %v362
    %420 = vmatpush.bf16.msra.mxu0 %v359
    %421 = vmatpush.bf16.msra.mxu0 %v356
    %422 = vmatpush.bf16.msra.mxu0 %v353
    %423 = vmatpush.bf16.msra.mxu0 %v350
    %424 = vmatpush.bf16.msra.mxu0 %v347
    %425 = vmatpush.bf16.msra.mxu0 %v344
    %426 = vmatmul.bf16.gmra.mxu0 %v194
    %v427 = vpop.f32.mrf.mxu0
    %v428 = vadd.f32 0.0, %v427
    %v429 = vpop.f32.mrf.mxu0
    %v430 = vadd.f32 0.0, %v429
    %431 = vdwg.mxu0
    %v464 = vunpack.c.l.b16 %v198
    %v465 = vunpack.c.h.b16 %v198
    %v466 = vunpack.c.l.b16 %v199
    %v467 = vunpack.c.l.b16 %v200
    %v468 = vunpack.c.h.b16 %v200
    %v469 = vunpack.c.l.b16 %v201
    %v470 = vunpack.c.l.b16 %v202
    %v471 = vunpack.c.h.b16 %v202
    %v472 = vunpack.c.l.b16 %v203
    %v473 = vunpack.c.l.b16 %v204
    %v474 = vunpack.c.h.b16 %v204
    %v475 = vunpack.c.l.b16 %v205
    %v476 = vunpack.c.l.b16 %v206
    %v477 = vunpack.c.h.b16 %v206
    %v478 = vunpack.c.l.b16 %v207
    %v479 = vunpack.c.l.b16 %v208
    %v480 = vunpack.c.h.b16 %v208
    %v481 = vunpack.c.l.b16 %v209
    %v482 = vunpack.c.l.b16 %v210
    %v483 = vunpack.c.h.b16 %v210
    %v484 = vunpack.c.l.b16 %v211
    %v485 = vunpack.c.l.b16 %v212
    %v486 = vunpack.c.h.b16 %v212
    %v487 = vunpack.c.l.b16 %v213
    %v488 = vunpack.c.l.b16 %v214
    %v489 = vunpack.c.h.b16 %v214
    %v490 = vunpack.c.l.b16 %v215
    %v491 = vunpack.c.l.b16 %v216
    %v492 = vunpack.c.h.b16 %v216
    %v493 = vunpack.c.l.b16 %v217
    %v494 = vunpack.c.l.b16 %v218
    %v495 = vunpack.c.h.b16 %v218
    %v496 = vunpack.c.l.b16 %v219
    %v497 = vunpack.c.l.b16 %v220
    %v498 = vunpack.c.h.b16 %v220
    %v499 = vunpack.c.l.b16 %v221
    %v500 = vunpack.c.l.b16 %v222
    %v501 = vunpack.c.h.b16 %v222
    %v502 = vunpack.c.l.b16 %v223
    %v503 = vunpack.c.l.b16 %v224
    %v504 = vunpack.c.h.b16 %v224
    %v505 = vunpack.c.l.b16 %v225
    %v506 = vunpack.c.l.b16 %v226
    %v507 = vunpack.c.h.b16 %v226
    %v508 = vunpack.c.l.b16 %v227
    %v509 = vunpack.c.l.b16 %v228
    %v510 = vunpack.c.h.b16 %v228
    %v511 = vunpack.c.l.b16 %v229
    %v512 = vpack.c.b16 %v467, %v464
    %v513 = vpack.c.b16 %v468, %v465
    %v514 = vpack.c.b16 %v469, %v466
    %v515 = vpack.c.b16 %v473, %v470
    %v516 = vpack.c.b16 %v474, %v471
    %v517 = vpack.c.b16 %v475, %v472
    %v518 = vpack.c.b16 %v479, %v476
    %v519 = vpack.c.b16 %v480, %v477
    %v520 = vpack.c.b16 %v481, %v478
    %v521 = vpack.c.b16 %v485, %v482
    %v522 = vpack.c.b16 %v486, %v483
    %v523 = vpack.c.b16 %v487, %v484
    %v524 = vpack.c.b16 %v491, %v488
    %v525 = vpack.c.b16 %v492, %v489
    %v526 = vpack.c.b16 %v493, %v490
    %v527 = vpack.c.b16 %v497, %v494
    %v528 = vpack.c.b16 %v498, %v495
    %v529 = vpack.c.b16 %v499, %v496
    %v530 = vpack.c.b16 %v503, %v500
    %v531 = vpack.c.b16 %v504, %v501
    %v532 = vpack.c.b16 %v505, %v502
    %v533 = vpack.c.b16 %v509, %v506
    %v534 = vpack.c.b16 %v510, %v507
    %v535 = vpack.c.b16 %v511, %v508
    %560 = vmatpush.bf16.msra.mxu0 %v533
    %561 = vmatpush.bf16.msra.mxu0 %v530
    %562 = vmatpush.bf16.msra.mxu0 %v527
    %563 = vmatpush.bf16.msra.mxu0 %v524
    %564 = vmatpush.bf16.msra.mxu0 %v521
    %565 = vmatpush.bf16.msra.mxu0 %v518
    %566 = vmatpush.bf16.msra.mxu0 %v515
    %567 = vmatpush.bf16.msra.mxu0 %v512
    %568 = vmatmul.bf16.gmra.mxu0 %v189
    %v569 = vpop.f32.mrf.mxu0
    %v570 = vadd.f32 %v400, %v569
    %v571 = vpop.f32.mrf.mxu0
    %v572 = vadd.f32 %v402, %v571
    %573 = vdwg.mxu0
    %574 = vmatpush.bf16.msra.mxu0 %v534
    %575 = vmatpush.bf16.msra.mxu0 %v531
    %576 = vmatpush.bf16.msra.mxu0 %v528
    %577 = vmatpush.bf16.msra.mxu0 %v525
    %578 = vmatpush.bf16.msra.mxu0 %v522
    %579 = vmatpush.bf16.msra.mxu0 %v519
    %580 = vmatpush.bf16.msra.mxu0 %v516
    %581 = vmatpush.bf16.msra.mxu0 %v513
    %582 = vmatmul.bf16.gmra.mxu0 %v189
    %v583 = vpop.f32.mrf.mxu0
    %v584 = vadd.f32 %v414, %v583
    %v585 = vpop.f32.mrf.mxu0
    %v586 = vadd.f32 %v416, %v585
    %587 = vdwg.mxu0
    %588 = vmatpush.bf16.msra.mxu0 %v535
    %589 = vmatpush.bf16.msra.mxu0 %v532
    %590 = vmatpush.bf16.msra.mxu0 %v529
    %591 = vmatpush.bf16.msra.mxu0 %v526
    %592 = vmatpush.bf16.msra.mxu0 %v523
    %593 = vmatpush.bf16.msra.mxu0 %v520
    %594 = vmatpush.bf16.msra.mxu0 %v517
    %595 = vmatpush.bf16.msra.mxu0 %v514
    %596 = vmatmul.bf16.gmra.mxu0 %v189
    %v597 = vpop.f32.mrf.mxu0
    %v598 = vadd.f32 %v428, %v597
    %v599 = vpop.f32.mrf.mxu0
    %v600 = vadd.f32 %v430, %v599
    %601 = vdwg.mxu0
    %v602 = vld [vmem:[%s7] sm:$0xff]
    %v603 = vld [vmem:[%s7 + $0x8] sm:$0xf]
    %v604 = vld [vmem:[%s7 + $0xc] sm:$0xff]
    %v605 = vld [vmem:[%s7 + $0x14] sm:$0xf]
    %v606 = vld [vmem:[%s7 + $0x18] sm:$0xff]
    %v607 = vld [vmem:[%s7 + $0x20] sm:$0xf]
    %v608 = vld [vmem:[%s7 + $0x24] sm:$0xff]
    %v609 = vld [vmem:[%s7 + $0x2c] sm:$0xf]
    %v610 = vld [vmem:[%s7 + $0x30] sm:$0xff]
    %v611 = vld [vmem:[%s7 + $0x38] sm:$0xf]
    %v612 = vld [vmem:[%s7 + $0x3c] sm:$0xff]
    %v613 = vld [vmem:[%s7 + $0x44] sm:$0xf]
    %v614 = vld [vmem:[%s7 + $0x48] sm:$0xff]
    %v615 = vld [vmem:[%s7 + $0x50] sm:$0xf]
    %v616 = vld [vmem:[%s7 + $0x54] sm:$0xff]
    %v617 = vld [vmem:[%s7 + $0x5c] sm:$0xf]
    %v634 = vunpack.c.l.b16 %v602
    %v635 = vunpack.c.h.b16 %v602
    %v636 = vunpack.c.l.b16 %v603
    %v637 = vunpack.c.l.b16 %v604
    %v638 = vunpack.c.h.b16 %v604
    %v639 = vunpack.c.l.b16 %v605
    %v640 = vunpack.c.l.b16 %v606
    %v641 = vunpack.c.h.b16 %v606
    %v642 = vunpack.c.l.b16 %v607
    %v643 = vunpack.c.l.b16 %v608
    %v644 = vunpack.c.h.b16 %v608
    %v645 = vunpack.c.l.b16 %v609
    %v646 = vunpack.c.l.b16 %v610
    %v647 = vunpack.c.h.b16 %v610
    %v648 = vunpack.c.l.b16 %v611
    %v649 = vunpack.c.l.b16 %v612
    %v650 = vunpack.c.h.b16 %v612
    %v651 = vunpack.c.l.b16 %v613
    %v652 = vunpack.c.l.b16 %v614
    %v653 = vunpack.c.h.b16 %v614
    %v654 = vunpack.c.l.b16 %v615
    %v655 = vunpack.c.l.b16 %v616
    %v656 = vunpack.c.h.b16 %v616
    %v657 = vunpack.c.l.b16 %v617
    %v658 = vpack.c.b16 %v637, %v634
    %v659 = vpack.c.b16 %v638, %v635
    %v660 = vpack.c.b16 %v639, %v636
    %v661 = vpack.c.b16 %v643, %v640
    %v662 = vpack.c.b16 %v644, %v641
    %v663 = vpack.c.b16 %v645, %v642
    %v664 = vpack.c.b16 %v649, %v646
    %v665 = vpack.c.b16 %v650, %v647
    %v666 = vpack.c.b16 %v651, %v648
    %v667 = vpack.c.b16 %v655, %v652
    %v668 = vpack.c.b16 %v656, %v653
    %v669 = vpack.c.b16 %v657, %v654
    %vm682 = vcmask 523264
    %v684 = vsel %vm682, %v197, 0
    %686 = vmatpush.bf16.msra.mxu0 0
    %687 = vmatpush.bf16.msra.mxu0 0
    %688 = vmatpush.bf16.msra.mxu0 0
    %689 = vmatpush.bf16.msra.mxu0 0
    %690 = vmatpush.bf16.msra.mxu0 %v667
    %691 = vmatpush.bf16.msra.mxu0 %v664
    %692 = vmatpush.bf16.msra.mxu0 %v661
    %693 = vmatpush.bf16.msra.mxu0 %v658
    %694 = vmatmul.bf16.gmra.mxu0 %v684
    %v695 = vpop.f32.mrf.mxu0
    %v696 = vadd.f32 0.0, %v695
    %v697 = vpop.f32.mrf.mxu0
    %v698 = vadd.f32 0.0, %v697
    %699 = vdwg.mxu0
    %700 = vmatpush.bf16.msra.mxu0 0
    %701 = vmatpush.bf16.msra.mxu0 0
    %702 = vmatpush.bf16.msra.mxu0 0
    %703 = vmatpush.bf16.msra.mxu0 0
    %704 = vmatpush.bf16.msra.mxu0 %v668
    %705 = vmatpush.bf16.msra.mxu0 %v665
    %706 = vmatpush.bf16.msra.mxu0 %v662
    %707 = vmatpush.bf16.msra.mxu0 %v659
    %708 = vmatmul.bf16.gmra.mxu0 %v684
    %v709 = vpop.f32.mrf.mxu0
    %v710 = vadd.f32 0.0, %v709
    %v711 = vpop.f32.mrf.mxu0
    %v712 = vadd.f32 0.0, %v711
    %713 = vdwg.mxu0
    %714 = vmatpush.bf16.msra.mxu0 0
    %715 = vmatpush.bf16.msra.mxu0 0
    %716 = vmatpush.bf16.msra.mxu0 0
    %717 = vmatpush.bf16.msra.mxu0 0
    %718 = vmatpush.bf16.msra.mxu0 %v669
    %719 = vmatpush.bf16.msra.mxu0 %v666
    %720 = vmatpush.bf16.msra.mxu0 %v663
    %721 = vmatpush.bf16.msra.mxu0 %v660
    %722 = vmatmul.bf16.gmra.mxu0 %v684
    %v723 = vpop.f32.mrf.mxu0
    %v724 = vadd.f32 0.0, %v723
    %v725 = vpop.f32.mrf.mxu0
    %v726 = vadd.f32 0.0, %v725
    %727 = vdwg.mxu0
    %v728 = vadd.f32 %v570, %v696
    %v729 = vadd.f32 %v584, %v710
    %v730 = vadd.f32 %v598, %v724
    %v731 = vadd.f32 %v572, %v698
    %v732 = vadd.f32 %v586, %v712
    %v733 = vadd.f32 %v600, %v726
    %v734 = vld [vmem:[%s8] sm:$0x7]
    %v736 = vperm.slane %v734, 0
    %v737 = vperm.slane %v734, 1
    %v738 = vperm.slane %v734, 2
    %v742 = vadd.f32 %v728, %v736
    %v743 = vadd.f32 %v729, %v737
    %v744 = vadd.f32 %v730, %v738
    %v745 = vadd.f32 %v731, %v736
    %v746 = vadd.f32 %v732, %v737
    %v747 = vadd.f32 %v733, %v738
    %v748 = vpack.c.bf16 %v745, %v742
    %v749 = vpack.c.bf16 %v746, %v743
    %v750 = vpack.c.bf16 %v747, %v744
    %v751 = vld [vmem:[#allocation2] sm:$0xff]
    %v752 = vld [vmem:[#allocation2 + $0x8] sm:$0xff]
    %v753 = vld [vmem:[#allocation2 + $0x10] sm:$0xff]
    %v754 = vld [vmem:[#allocation2 + $0x18] sm:$0xff]
    %v755 = vld [vmem:[#allocation2 + $0x20] sm:$0xf]
    %v756 = vld [vmem:[#allocation2 + $0x24] sm:$0xff]
    %v757 = vld [vmem:[#allocation2 + $0x2c] sm:$0xff]
    %v758 = vld [vmem:[#allocation2 + $0x34] sm:$0xff]
    %v759 = vld [vmem:[#allocation2 + $0x3c] sm:$0xff]
    %v760 = vld [vmem:[#allocation2 + $0x44] sm:$0xf]
    %v761 = vld [vmem:[#allocation2 + $0x48] sm:$0xff]
    %v762 = vld [vmem:[#allocation2 + $0x50] sm:$0xff]
    %v763 = vld [vmem:[#allocation2 + $0x58] sm:$0xff]
    %v764 = vld [vmem:[#allocation2 + $0x60] sm:$0xff]
    %v765 = vld [vmem:[#allocation2 + $0x68] sm:$0xf]
    %v766 = vld [vmem:[#allocation2 + $0x6c] sm:$0xff]
    %v767 = vld [vmem:[#allocation2 + $0x74] sm:$0xff]
    %v768 = vld [vmem:[#allocation2 + $0x7c] sm:$0xff]
    %v769 = vld [vmem:[#allocation2 + $0x84] sm:$0xff]
    %v770 = vld [vmem:[#allocation2 + $0x8c] sm:$0xf]
    %v771 = vld [vmem:[#allocation2 + $0x90] sm:$0xff]
    %v772 = vld [vmem:[#allocation2 + $0x98] sm:$0xff]
    %v773 = vld [vmem:[#allocation2 + $0xa0] sm:$0xff]
    %v774 = vld [vmem:[#allocation2 + $0xa8] sm:$0xff]
    %v775 = vld [vmem:[#allocation2 + $0xb0] sm:$0xf]
    %v776 = vld [vmem:[#allocation2 + $0xb4] sm:$0xff]
    %v777 = vld [vmem:[#allocation2 + $0xbc] sm:$0xff]
    %v778 = vld [vmem:[#allocation2 + $0xc4] sm:$0xff]
    %v779 = vld [vmem:[#allocation2 + $0xcc] sm:$0xff]
    %v780 = vld [vmem:[#allocation2 + $0xd4] sm:$0xf]
    %v781 = vld [vmem:[#allocation2 + $0xd8] sm:$0xff]
    %v782 = vld [vmem:[#allocation2 + $0xe0] sm:$0xff]
    %v783 = vld [vmem:[#allocation2 + $0xe8] sm:$0xff]
    %v784 = vld [vmem:[#allocation2 + $0xf0] sm:$0xff]
    %v785 = vld [vmem:[#allocation2 + $0xf8] sm:$0xf]
    %v786 = vld [vmem:[#allocation2 + $0xfc] sm:$0xff]
    %v787 = vld [vmem:[#allocation2 + $0x104] sm:$0xff]
    %v788 = vld [vmem:[#allocation2 + $0x10c] sm:$0xff]
    %v789 = vld [vmem:[#allocation2 + $0x114] sm:$0xff]
    %v790 = vld [vmem:[#allocation2 + $0x11c] sm:$0xf]
    %v791 = vld [vmem:[#allocation2 + $0x120] sm:$0xff]
    %v792 = vld [vmem:[#allocation2 + $0x128] sm:$0xff]
    %v793 = vld [vmem:[#allocation2 + $0x130] sm:$0xff]
    %v794 = vld [vmem:[#allocation2 + $0x138] sm:$0xff]
    %v795 = vld [vmem:[#allocation2 + $0x140] sm:$0xf]
    %v796 = vld [vmem:[#allocation2 + $0x144] sm:$0xff]
    %v797 = vld [vmem:[#allocation2 + $0x14c] sm:$0xff]
    %v798 = vld [vmem:[#allocation2 + $0x154] sm:$0xff]
    %v799 = vld [vmem:[#allocation2 + $0x15c] sm:$0xff]
    %v800 = vld [vmem:[#allocation2 + $0x164] sm:$0xf]
    %v801 = vld [vmem:[#allocation2 + $0x168] sm:$0xff]
    %v802 = vld [vmem:[#allocation2 + $0x170] sm:$0xff]
    %v803 = vld [vmem:[#allocation2 + $0x178] sm:$0xff]
    %v804 = vld [vmem:[#allocation2 + $0x180] sm:$0xff]
    %v805 = vld [vmem:[#allocation2 + $0x188] sm:$0xf]
    %v806 = vld [vmem:[#allocation2 + $0x18c] sm:$0xff]
    %v807 = vld [vmem:[#allocation2 + $0x194] sm:$0xff]
    %v808 = vld [vmem:[#allocation2 + $0x19c] sm:$0xff]
    %v809 = vld [vmem:[#allocation2 + $0x1a4] sm:$0xff]
    %v810 = vld [vmem:[#allocation2 + $0x1ac] sm:$0xf]
    %v811 = vld [vmem:[#allocation2 + $0x1b0] sm:$0xff]
    %v812 = vld [vmem:[#allocation2 + $0x1b8] sm:$0xff]
    %v813 = vld [vmem:[#allocation2 + $0x1c0] sm:$0xff]
    %v814 = vld [vmem:[#allocation2 + $0x1c8] sm:$0xff]
    %v815 = vld [vmem:[#allocation2 + $0x1d0] sm:$0xf]
    %v816 = vld [vmem:[#allocation2 + $0x1d4] sm:$0xff]
    %v817 = vld [vmem:[#allocation2 + $0x1dc] sm:$0xff]
    %v818 = vld [vmem:[#allocation2 + $0x1e4] sm:$0xff]
    %v819 = vld [vmem:[#allocation2 + $0x1ec] sm:$0xff]
    %v820 = vld [vmem:[#allocation2 + $0x1f4] sm:$0xf]
    %v821 = vld [vmem:[#allocation2 + $0x1f8] sm:$0xff]
    %v822 = vld [vmem:[#allocation2 + $0x200] sm:$0xff]
    %v823 = vld [vmem:[#allocation2 + $0x208] sm:$0xff]
    %v824 = vld [vmem:[#allocation2 + $0x210] sm:$0xff]
    %v825 = vld [vmem:[#allocation2 + $0x218] sm:$0xf]
    %v826 = vld [vmem:[#allocation2 + $0x21c] sm:$0xff]
    %v827 = vld [vmem:[#allocation2 + $0x224] sm:$0xff]
    %v828 = vld [vmem:[#allocation2 + $0x22c] sm:$0xff]
    %v829 = vld [vmem:[#allocation2 + $0x234] sm:$0xff]
    %v830 = vld [vmem:[#allocation2 + $0x23c] sm:$0xf]
    %v831 = vld [vmem:[#allocation2 + $0x240] sm:$0xff]
    %v832 = vld [vmem:[#allocation2 + $0x248] sm:$0xff]
    %v833 = vld [vmem:[#allocation2 + $0x250] sm:$0xff]
    %v834 = vld [vmem:[#allocation2 + $0x258] sm:$0xff]
    %v835 = vld [vmem:[#allocation2 + $0x260] sm:$0xf]
    %v836 = vld [vmem:[#allocation2 + $0x264] sm:$0xff]
    %v837 = vld [vmem:[#allocation2 + $0x26c] sm:$0xff]
    %v838 = vld [vmem:[#allocation2 + $0x274] sm:$0xff]
    %v839 = vld [vmem:[#allocation2 + $0x27c] sm:$0xff]
    %v840 = vld [vmem:[#allocation2 + $0x284] sm:$0xf]
    %v841 = vld [vmem:[#allocation2 + $0x288] sm:$0xff]
    %v842 = vld [vmem:[#allocation2 + $0x290] sm:$0xff]
    %v843 = vld [vmem:[#allocation2 + $0x298] sm:$0xff]
    %v844 = vld [vmem:[#allocation2 + $0x2a0] sm:$0xff]
    %v845 = vld [vmem:[#allocation2 + $0x2a8] sm:$0xf]
    %v846 = vld [vmem:[#allocation2 + $0x2ac] sm:$0xff]
    %v847 = vld [vmem:[#allocation2 + $0x2b4] sm:$0xff]
    %v848 = vld [vmem:[#allocation2 + $0x2bc] sm:$0xff]
    %v849 = vld [vmem:[#allocation2 + $0x2c4] sm:$0xff]
    %v850 = vld [vmem:[#allocation2 + $0x2cc] sm:$0xf]
    %v851 = vld [vmem:[#allocation2 + $0x2d0] sm:$0xff]
    %v852 = vld [vmem:[#allocation2 + $0x2d8] sm:$0xff]
    %v853 = vld [vmem:[#allocation2 + $0x2e0] sm:$0xff]
    %v854 = vld [vmem:[#allocation2 + $0x2e8] sm:$0xff]
    %v855 = vld [vmem:[#allocation2 + $0x2f0] sm:$0xf]
    %v856 = vld [vmem:[#allocation2 + $0x2f4] sm:$0xff]
    %v857 = vld [vmem:[#allocation2 + $0x2fc] sm:$0xff]
    %v858 = vld [vmem:[#allocation2 + $0x304] sm:$0xff]
    %v859 = vld [vmem:[#allocation2 + $0x30c] sm:$0xff]
    %v860 = vld [vmem:[#allocation2 + $0x314] sm:$0xf]
    %v861 = vld [vmem:[#allocation2 + $0x318] sm:$0xff]
    %v862 = vld [vmem:[#allocation2 + $0x320] sm:$0xff]
    %v863 = vld [vmem:[#allocation2 + $0x328] sm:$0xff]
    %v864 = vld [vmem:[#allocation2 + $0x330] sm:$0xff]
    %v865 = vld [vmem:[#allocation2 + $0x338] sm:$0xf]
    %v866 = vld [vmem:[#allocation2 + $0x33c] sm:$0xff]
    %v867 = vld [vmem:[#allocation2 + $0x344] sm:$0xff]
    %v868 = vld [vmem:[#allocation2 + $0x34c] sm:$0xff]
    %v869 = vld [vmem:[#allocation2 + $0x354] sm:$0xff]
    %v870 = vld [vmem:[#allocation2 + $0x35c] sm:$0xf]
    %v871 = vld [vmem:[#allocation2 + $0x360] sm:$0xff]
    %v872 = vld [vmem:[#allocation2 + $0x368] sm:$0xff]
    %v873 = vld [vmem:[#allocation2 + $0x370] sm:$0xff]
    %v874 = vld [vmem:[#allocation2 + $0x378] sm:$0xff]
    %v875 = vld [vmem:[#allocation2 + $0x380] sm:$0xf]
    %v876 = vld [vmem:[#allocation2 + $0x384] sm:$0xff]
    %v877 = vld [vmem:[#allocation2 + $0x38c] sm:$0xff]
    %v878 = vld [vmem:[#allocation2 + $0x394] sm:$0xff]
    %v879 = vld [vmem:[#allocation2 + $0x39c] sm:$0xff]
    %v880 = vld [vmem:[#allocation2 + $0x3a4] sm:$0xf]
    %v881 = vld [vmem:[#allocation2 + $0x3a8] sm:$0xff]
    %v882 = vld [vmem:[#allocation2 + $0x3b0] sm:$0xff]
    %v883 = vld [vmem:[#allocation2 + $0x3b8] sm:$0xff]
    %v884 = vld [vmem:[#allocation2 + $0x3c0] sm:$0xff]
    %v885 = vld [vmem:[#allocation2 + $0x3c8] sm:$0xf]
    %v886 = vld [vmem:[#allocation2 + $0x3cc] sm:$0xff]
    %v887 = vld [vmem:[#allocation2 + $0x3d4] sm:$0xff]
    %v888 = vld [vmem:[#allocation2 + $0x3dc] sm:$0xff]
    %v889 = vld [vmem:[#allocation2 + $0x3e4] sm:$0xff]
    %v890 = vld [vmem:[#allocation2 + $0x3ec] sm:$0xf]
    %v891 = vld [vmem:[#allocation2 + $0x3f0] sm:$0xff]
    %v892 = vld [vmem:[#allocation2 + $0x3f8] sm:$0xff]
    %v893 = vld [vmem:[#allocation2 + $0x400] sm:$0xff]
    %v894 = vld [vmem:[#allocation2 + $0x408] sm:$0xff]
    %v895 = vld [vmem:[#allocation2 + $0x410] sm:$0xf]
    %v896 = vld [vmem:[#allocation2 + $0x414] sm:$0xff]
    %v897 = vld [vmem:[#allocation2 + $0x41c] sm:$0xff]
    %v898 = vld [vmem:[#allocation2 + $0x424] sm:$0xff]
    %v899 = vld [vmem:[#allocation2 + $0x42c] sm:$0xff]
    %v900 = vld [vmem:[#allocation2 + $0x434] sm:$0xf]
    %v901 = vld [vmem:[#allocation2 + $0x438] sm:$0xff]
    %v902 = vld [vmem:[#allocation2 + $0x440] sm:$0xff]
    %v903 = vld [vmem:[#allocation2 + $0x448] sm:$0xff]
    %v904 = vld [vmem:[#allocation2 + $0x450] sm:$0xff]
    %v905 = vld [vmem:[#allocation2 + $0x458] sm:$0xf]
    %v906 = vld [vmem:[#allocation2 + $0x45c] sm:$0xff]
    %v907 = vld [vmem:[#allocation2 + $0x464] sm:$0xff]
    %v908 = vld [vmem:[#allocation2 + $0x46c] sm:$0xff]
    %v909 = vld [vmem:[#allocation2 + $0x474] sm:$0xff]
    %v910 = vld [vmem:[#allocation2 + $0x47c] sm:$0xf]
    %v911 = vld [vmem:[#allocation2 + $0x480] sm:$0xff]
    %v912 = vld [vmem:[#allocation2 + $0x488] sm:$0xff]
    %v913 = vld [vmem:[#allocation2 + $0x490] sm:$0xff]
    %v914 = vld [vmem:[#allocation2 + $0x498] sm:$0xff]
    %v915 = vld [vmem:[#allocation2 + $0x4a0] sm:$0xf]
    %v916 = vld [vmem:[#allocation2 + $0x4a4] sm:$0xff]
    %v917 = vld [vmem:[#allocation2 + $0x4ac] sm:$0xff]
    %v918 = vld [vmem:[#allocation2 + $0x4b4] sm:$0xff]
    %v919 = vld [vmem:[#allocation2 + $0x4bc] sm:$0xff]
    %v920 = vld [vmem:[#allocation2 + $0x4c4] sm:$0xf]
    %v921 = vld [vmem:[#allocation2 + $0x4c8] sm:$0xff]
    %v922 = vld [vmem:[#allocation2 + $0x4d0] sm:$0xff]
    %v923 = vld [vmem:[#allocation2 + $0x4d8] sm:$0xff]
    %v924 = vld [vmem:[#allocation2 + $0x4e0] sm:$0xff]
    %v925 = vld [vmem:[#allocation2 + $0x4e8] sm:$0xf]
    %v926 = vld [vmem:[#allocation2 + $0x4ec] sm:$0xff]
    %v927 = vld [vmem:[#allocation2 + $0x4f4] sm:$0xff]
    %v928 = vld [vmem:[#allocation2 + $0x4fc] sm:$0xff]
    %v929 = vld [vmem:[#allocation2 + $0x504] sm:$0xff]
    %v930 = vld [vmem:[#allocation2 + $0x50c] sm:$0xf]
    %v931 = vld [vmem:[#allocation2 + $0x510] sm:$0xff]
    %v932 = vld [vmem:[#allocation2 + $0x518] sm:$0xff]
    %v933 = vld [vmem:[#allocation2 + $0x520] sm:$0xff]
    %v934 = vld [vmem:[#allocation2 + $0x528] sm:$0xff]
    %v935 = vld [vmem:[#allocation2 + $0x530] sm:$0xf]
    %v936 = vld [vmem:[#allocation2 + $0x534] sm:$0xff]
    %v937 = vld [vmem:[#allocation2 + $0x53c] sm:$0xff]
    %v938 = vld [vmem:[#allocation2 + $0x544] sm:$0xff]
    %v939 = vld [vmem:[#allocation2 + $0x54c] sm:$0xff]
    %v940 = vld [vmem:[#allocation2 + $0x554] sm:$0xf]
    %v941 = vld [vmem:[#allocation2 + $0x558] sm:$0xff]
    %v942 = vld [vmem:[#allocation2 + $0x560] sm:$0xff]
    %v943 = vld [vmem:[#allocation2 + $0x568] sm:$0xff]
    %v944 = vld [vmem:[#allocation2 + $0x570] sm:$0xff]
    %v945 = vld [vmem:[#allocation2 + $0x578] sm:$0xf]
    %v946 = vld [vmem:[#allocation2 + $0x57c] sm:$0xff]
    %v947 = vld [vmem:[#allocation2 + $0x584] sm:$0xff]
    %v948 = vld [vmem:[#allocation2 + $0x58c] sm:$0xff]
    %v949 = vld [vmem:[#allocation2 + $0x594] sm:$0xff]
    %v950 = vld [vmem:[#allocation2 + $0x59c] sm:$0xf]
    %v951 = vld [vmem:[%s10] sm:$0xff]
    %v952 = vld [vmem:[%s10 + $0x8] sm:$0x1]
    %v955 = vperm.slane %v951, 0
    %v956 = vperm.slane %v951, 1
    %v957 = vperm.slane %v951, 2
    %v958 = vperm.slane %v951, 3
    %v959 = vperm.slane %v951, 4
    %v960 = vperm.slane %v951, 5
    %v961 = vperm.slane %v951, 6
    %v962 = vperm.slane %v951, 7
    %v963 = vperm.slane %v952, 0
    %v1173 = vunpack.c.l.b16 %v751
    %v1174 = vunpack.c.h.b16 %v751
    %v1175 = vunpack.c.l.b16 %v752
    %v1176 = vunpack.c.h.b16 %v752
    %v1177 = vunpack.c.l.b16 %v753
    %v1178 = vunpack.c.h.b16 %v753
    %v1179 = vunpack.c.l.b16 %v754
    %v1180 = vunpack.c.h.b16 %v754
    %v1181 = vunpack.c.l.b16 %v755
    %v1182 = vunpack.c.l.b16 %v756
    %v1183 = vunpack.c.h.b16 %v756
    %v1184 = vunpack.c.l.b16 %v757
    %v1185 = vunpack.c.h.b16 %v757
    %v1186 = vunpack.c.l.b16 %v758
    %v1187 = vunpack.c.h.b16 %v758
    %v1188 = vunpack.c.l.b16 %v759
    %v1189 = vunpack.c.h.b16 %v759
    %v1190 = vunpack.c.l.b16 %v760
    %v1191 = vunpack.c.l.b16 %v761
    %v1192 = vunpack.c.h.b16 %v761
    %v1193 = vunpack.c.l.b16 %v762
    %v1194 = vunpack.c.h.b16 %v762
    %v1195 = vunpack.c.l.b16 %v763
    %v1196 = vunpack.c.h.b16 %v763
    %v1197 = vunpack.c.l.b16 %v764
    %v1198 = vunpack.c.h.b16 %v764
    %v1199 = vunpack.c.l.b16 %v765
    %v1200 = vunpack.c.l.b16 %v766
    %v1201 = vunpack.c.h.b16 %v766
    %v1202 = vunpack.c.l.b16 %v767
    %v1203 = vunpack.c.h.b16 %v767
    %v1204 = vunpack.c.l.b16 %v768
    %v1205 = vunpack.c.h.b16 %v768
    %v1206 = vunpack.c.l.b16 %v769
    %v1207 = vunpack.c.h.b16 %v769
    %v1208 = vunpack.c.l.b16 %v770
    %v1209 = vunpack.c.l.b16 %v771
    %v1210 = vunpack.c.h.b16 %v771
    %v1211 = vunpack.c.l.b16 %v772
    %v1212 = vunpack.c.h.b16 %v772
    %v1213 = vunpack.c.l.b16 %v773
    %v1214 = vunpack.c.h.b16 %v773
    %v1215 = vunpack.c.l.b16 %v774
    %v1216 = vunpack.c.h.b16 %v774
    %v1217 = vunpack.c.l.b16 %v775
    %v1218 = vunpack.c.l.b16 %v776
    %v1219 = vunpack.c.h.b16 %v776
    %v1220 = vunpack.c.l.b16 %v777
    %v1221 = vunpack.c.h.b16 %v777
    %v1222 = vunpack.c.l.b16 %v778
    %v1223 = vunpack.c.h.b16 %v778
    %v1224 = vunpack.c.l.b16 %v779
    %v1225 = vunpack.c.h.b16 %v779
    %v1226 = vunpack.c.l.b16 %v780
    %v1227 = vunpack.c.l.b16 %v781
    %v1228 = vunpack.c.h.b16 %v781
    %v1229 = vunpack.c.l.b16 %v782
    %v1230 = vunpack.c.h.b16 %v782
    %v1231 = vunpack.c.l.b16 %v783
    %v1232 = vunpack.c.h.b16 %v783
    %v1233 = vunpack.c.l.b16 %v784
    %v1234 = vunpack.c.h.b16 %v784
    %v1235 = vunpack.c.l.b16 %v785
    %v1236 = vunpack.c.l.b16 %v786
    %v1237 = vunpack.c.h.b16 %v786
    %v1238 = vunpack.c.l.b16 %v787
    %v1239 = vunpack.c.h.b16 %v787
    %v1240 = vunpack.c.l.b16 %v788
    %v1241 = vunpack.c.h.b16 %v788
    %v1242 = vunpack.c.l.b16 %v789
    %v1243 = vunpack.c.h.b16 %v789
    %v1244 = vunpack.c.l.b16 %v790
    %v1245 = vunpack.c.l.b16 %v791
    %v1246 = vunpack.c.h.b16 %v791
    %v1247 = vunpack.c.l.b16 %v792
    %v1248 = vunpack.c.h.b16 %v792
    %v1249 = vunpack.c.l.b16 %v793
    %v1250 = vunpack.c.h.b16 %v793
    %v1251 = vunpack.c.l.b16 %v794
    %v1252 = vunpack.c.h.b16 %v794
    %v1253 = vunpack.c.l.b16 %v795
    %v1254 = vunpack.c.l.b16 %v796
    %v1255 = vunpack.c.h.b16 %v796
    %v1256 = vunpack.c.l.b16 %v797
    %v1257 = vunpack.c.h.b16 %v797
    %v1258 = vunpack.c.l.b16 %v798
    %v1259 = vunpack.c.h.b16 %v798
    %v1260 = vunpack.c.l.b16 %v799
    %v1261 = vunpack.c.h.b16 %v799
    %v1262 = vunpack.c.l.b16 %v800
    %v1263 = vunpack.c.l.b16 %v801
    %v1264 = vunpack.c.h.b16 %v801
    %v1265 = vunpack.c.l.b16 %v802
    %v1266 = vunpack.c.h.b16 %v802
    %v1267 = vunpack.c.l.b16 %v803
    %v1268 = vunpack.c.h.b16 %v803
    %v1269 = vunpack.c.l.b16 %v804
    %v1270 = vunpack.c.h.b16 %v804
    %v1271 = vunpack.c.l.b16 %v805
    %v1272 = vunpack.c.l.b16 %v806
    %v1273 = vunpack.c.h.b16 %v806
    %v1274 = vunpack.c.l.b16 %v807
    %v1275 = vunpack.c.h.b16 %v807
    %v1276 = vunpack.c.l.b16 %v808
    %v1277 = vunpack.c.h.b16 %v808
    %v1278 = vunpack.c.l.b16 %v809
    %v1279 = vunpack.c.h.b16 %v809
    %v1280 = vunpack.c.l.b16 %v810
    %v1281 = vunpack.c.l.b16 %v811
    %v1282 = vunpack.c.h.b16 %v811
    %v1283 = vunpack.c.l.b16 %v812
    %v1284 = vunpack.c.h.b16 %v812
    %v1285 = vunpack.c.l.b16 %v813
    %v1286 = vunpack.c.h.b16 %v813
    %v1287 = vunpack.c.l.b16 %v814
    %v1288 = vunpack.c.h.b16 %v814
    %v1289 = vunpack.c.l.b16 %v815
    %v1290 = vunpack.c.l.b16 %v816
    %v1291 = vunpack.c.h.b16 %v816
    %v1292 = vunpack.c.l.b16 %v817
    %v1293 = vunpack.c.h.b16 %v817
    %v1294 = vunpack.c.l.b16 %v818
    %v1295 = vunpack.c.h.b16 %v818
    %v1296 = vunpack.c.l.b16 %v819
    %v1297 = vunpack.c.h.b16 %v819
    %v1298 = vunpack.c.l.b16 %v820
    %v1299 = vunpack.c.l.b16 %v821
    %v1300 = vunpack.c.h.b16 %v821
    %v1301 = vunpack.c.l.b16 %v822
    %v1302 = vunpack.c.h.b16 %v822
    %v1303 = vunpack.c.l.b16 %v823
    %v1304 = vunpack.c.h.b16 %v823
    %v1305 = vunpack.c.l.b16 %v824
    %v1306 = vunpack.c.h.b16 %v824
    %v1307 = vunpack.c.l.b16 %v825
    %v1308 = vunpack.c.l.b16 %v826
    %v1309 = vunpack.c.h.b16 %v826
    %v1310 = vunpack.c.l.b16 %v827
    %v1311 = vunpack.c.h.b16 %v827
    %v1312 = vunpack.c.l.b16 %v828
    %v1313 = vunpack.c.h.b16 %v828
    %v1314 = vunpack.c.l.b16 %v829
    %v1315 = vunpack.c.h.b16 %v829
    %v1316 = vunpack.c.l.b16 %v830
    %v1317 = vunpack.c.l.b16 %v831
    %v1318 = vunpack.c.h.b16 %v831
    %v1319 = vunpack.c.l.b16 %v832
    %v1320 = vunpack.c.h.b16 %v832
    %v1321 = vunpack.c.l.b16 %v833
    %v1322 = vunpack.c.h.b16 %v833
    %v1323 = vunpack.c.l.b16 %v834
    %v1324 = vunpack.c.h.b16 %v834
    %v1325 = vunpack.c.l.b16 %v835
    %v1326 = vunpack.c.l.b16 %v836
    %v1327 = vunpack.c.h.b16 %v836
    %v1328 = vunpack.c.l.b16 %v837
    %v1329 = vunpack.c.h.b16 %v837
    %v1330 = vunpack.c.l.b16 %v838
    %v1331 = vunpack.c.h.b16 %v838
    %v1332 = vunpack.c.l.b16 %v839
    %v1333 = vunpack.c.h.b16 %v839
    %v1334 = vunpack.c.l.b16 %v840
    %v1335 = vunpack.c.l.b16 %v841
    %v1336 = vunpack.c.h.b16 %v841
    %v1337 = vunpack.c.l.b16 %v842
    %v1338 = vunpack.c.h.b16 %v842
    %v1339 = vunpack.c.l.b16 %v843
    %v1340 = vunpack.c.h.b16 %v843
    %v1341 = vunpack.c.l.b16 %v844
    %v1342 = vunpack.c.h.b16 %v844
    %v1343 = vunpack.c.l.b16 %v845
    %v1344 = vunpack.c.l.b16 %v846
    %v1345 = vunpack.c.h.b16 %v846
    %v1346 = vunpack.c.l.b16 %v847
    %v1347 = vunpack.c.h.b16 %v847
    %v1348 = vunpack.c.l.b16 %v848
    %v1349 = vunpack.c.h.b16 %v848
    %v1350 = vunpack.c.l.b16 %v849
    %v1351 = vunpack.c.h.b16 %v849
    %v1352 = vunpack.c.l.b16 %v850
    %v1353 = vunpack.c.l.b16 %v851
    %v1354 = vunpack.c.h.b16 %v851
    %v1355 = vunpack.c.l.b16 %v852
    %v1356 = vunpack.c.h.b16 %v852
    %v1357 = vunpack.c.l.b16 %v853
    %v1358 = vunpack.c.h.b16 %v853
    %v1359 = vunpack.c.l.b16 %v854
    %v1360 = vunpack.c.h.b16 %v854
    %v1361 = vunpack.c.l.b16 %v855
    %v1362 = vunpack.c.l.b16 %v856
    %v1363 = vunpack.c.h.b16 %v856
    %v1364 = vunpack.c.l.b16 %v857
    %v1365 = vunpack.c.h.b16 %v857
    %v1366 = vunpack.c.l.b16 %v858
    %v1367 = vunpack.c.h.b16 %v858
    %v1368 = vunpack.c.l.b16 %v859
    %v1369 = vunpack.c.h.b16 %v859
    %v1370 = vunpack.c.l.b16 %v860
    %v1371 = vunpack.c.l.b16 %v861
    %v1372 = vunpack.c.h.b16 %v861
    %v1373 = vunpack.c.l.b16 %v862
    %v1374 = vunpack.c.h.b16 %v862
    %v1375 = vunpack.c.l.b16 %v863
    %v1376 = vunpack.c.h.b16 %v863
    %v1377 = vunpack.c.l.b16 %v864
    %v1378 = vunpack.c.h.b16 %v864
    %v1379 = vunpack.c.l.b16 %v865
    %v1380 = vunpack.c.l.b16 %v866
    %v1381 = vunpack.c.h.b16 %v866
    %v1382 = vunpack.c.l.b16 %v867
    %v1383 = vunpack.c.h.b16 %v867
    %v1384 = vunpack.c.l.b16 %v868
    %v1385 = vunpack.c.h.b16 %v868
    %v1386 = vunpack.c.l.b16 %v869
    %v1387 = vunpack.c.h.b16 %v869
    %v1388 = vunpack.c.l.b16 %v870
    %v1389 = vunpack.c.l.b16 %v871
    %v1390 = vunpack.c.h.b16 %v871
    %v1391 = vunpack.c.l.b16 %v872
    %v1392 = vunpack.c.h.b16 %v872
    %v1393 = vunpack.c.l.b16 %v873
    %v1394 = vunpack.c.h.b16 %v873
    %v1395 = vunpack.c.l.b16 %v874
    %v1396 = vunpack.c.h.b16 %v874
    %v1397 = vunpack.c.l.b16 %v875
    %v1398 = vunpack.c.l.b16 %v876
    %v1399 = vunpack.c.h.b16 %v876
    %v1400 = vunpack.c.l.b16 %v877
    %v1401 = vunpack.c.h.b16 %v877
    %v1402 = vunpack.c.l.b16 %v878
    %v1403 = vunpack.c.h.b16 %v878
    %v1404 = vunpack.c.l.b16 %v879
    %v1405 = vunpack.c.h.b16 %v879
    %v1406 = vunpack.c.l.b16 %v880
    %v1407 = vunpack.c.l.b16 %v881
    %v1408 = vunpack.c.h.b16 %v881
    %v1409 = vunpack.c.l.b16 %v882
    %v1410 = vunpack.c.h.b16 %v882
    %v1411 = vunpack.c.l.b16 %v883
    %v1412 = vunpack.c.h.b16 %v883
    %v1413 = vunpack.c.l.b16 %v884
    %v1414 = vunpack.c.h.b16 %v884
    %v1415 = vunpack.c.l.b16 %v885
    %v1416 = vunpack.c.l.b16 %v886
    %v1417 = vunpack.c.h.b16 %v886
    %v1418 = vunpack.c.l.b16 %v887
    %v1419 = vunpack.c.h.b16 %v887
    %v1420 = vunpack.c.l.b16 %v888
    %v1421 = vunpack.c.h.b16 %v888
    %v1422 = vunpack.c.l.b16 %v889
    %v1423 = vunpack.c.h.b16 %v889
    %v1424 = vunpack.c.l.b16 %v890
    %v1425 = vunpack.c.l.b16 %v891
    %v1426 = vunpack.c.h.b16 %v891
    %v1427 = vunpack.c.l.b16 %v892
    %v1428 = vunpack.c.h.b16 %v892
    %v1429 = vunpack.c.l.b16 %v893
    %v1430 = vunpack.c.h.b16 %v893
    %v1431 = vunpack.c.l.b16 %v894
    %v1432 = vunpack.c.h.b16 %v894
    %v1433 = vunpack.c.l.b16 %v895
    %v1434 = vunpack.c.l.b16 %v896
    %v1435 = vunpack.c.h.b16 %v896
    %v1436 = vunpack.c.l.b16 %v897
    %v1437 = vunpack.c.h.b16 %v897
    %v1438 = vunpack.c.l.b16 %v898
    %v1439 = vunpack.c.h.b16 %v898
    %v1440 = vunpack.c.l.b16 %v899
    %v1441 = vunpack.c.h.b16 %v899
    %v1442 = vunpack.c.l.b16 %v900
    %v1443 = vunpack.c.l.b16 %v901
    %v1444 = vunpack.c.h.b16 %v901
    %v1445 = vunpack.c.l.b16 %v902
    %v1446 = vunpack.c.h.b16 %v902
    %v1447 = vunpack.c.l.b16 %v903
    %v1448 = vunpack.c.h.b16 %v903
    %v1449 = vunpack.c.l.b16 %v904
    %v1450 = vunpack.c.h.b16 %v904
    %v1451 = vunpack.c.l.b16 %v905
    %v1452 = vunpack.c.l.b16 %v906
    %v1453 = vunpack.c.h.b16 %v906
    %v1454 = vunpack.c.l.b16 %v907
    %v1455 = vunpack.c.h.b16 %v907
    %v1456 = vunpack.c.l.b16 %v908
    %v1457 = vunpack.c.h.b16 %v908
    %v1458 = vunpack.c.l.b16 %v909
    %v1459 = vunpack.c.h.b16 %v909
    %v1460 = vunpack.c.l.b16 %v910
    %v1461 = vunpack.c.l.b16 %v911
    %v1462 = vunpack.c.h.b16 %v911
    %v1463 = vunpack.c.l.b16 %v912
    %v1464 = vunpack.c.h.b16 %v912
    %v1465 = vunpack.c.l.b16 %v913
    %v1466 = vunpack.c.h.b16 %v913
    %v1467 = vunpack.c.l.b16 %v914
    %v1468 = vunpack.c.h.b16 %v914
    %v1469 = vunpack.c.l.b16 %v915
    %v1470 = vunpack.c.l.b16 %v916
    %v1471 = vunpack.c.h.b16 %v916
    %v1472 = vunpack.c.l.b16 %v917
    %v1473 = vunpack.c.h.b16 %v917
    %v1474 = vunpack.c.l.b16 %v918
    %v1475 = vunpack.c.h.b16 %v918
    %v1476 = vunpack.c.l.b16 %v919
    %v1477 = vunpack.c.h.b16 %v919
    %v1478 = vunpack.c.l.b16 %v920
    %v1479 = vunpack.c.l.b16 %v921
    %v1480 = vunpack.c.h.b16 %v921
    %v1481 = vunpack.c.l.b16 %v922
    %v1482 = vunpack.c.h.b16 %v922
    %v1483 = vunpack.c.l.b16 %v923
    %v1484 = vunpack.c.h.b16 %v923
    %v1485 = vunpack.c.l.b16 %v924
    %v1486 = vunpack.c.h.b16 %v924
    %v1487 = vunpack.c.l.b16 %v925
    %v1488 = vunpack.c.l.b16 %v926
    %v1489 = vunpack.c.h.b16 %v926
    %v1490 = vunpack.c.l.b16 %v927
    %v1491 = vunpack.c.h.b16 %v927
    %v1492 = vunpack.c.l.b16 %v928
    %v1493 = vunpack.c.h.b16 %v928
    %v1494 = vunpack.c.l.b16 %v929
    %v1495 = vunpack.c.h.b16 %v929
    %v1496 = vunpack.c.l.b16 %v930
    %v1497 = vunpack.c.l.b16 %v931
    %v1498 = vunpack.c.h.b16 %v931
    %v1499 = vunpack.c.l.b16 %v932
    %v1500 = vunpack.c.h.b16 %v932
    %v1501 = vunpack.c.l.b16 %v933
    %v1502 = vunpack.c.h.b16 %v933
    %v1503 = vunpack.c.l.b16 %v934
    %v1504 = vunpack.c.h.b16 %v934
    %v1505 = vunpack.c.l.b16 %v935
    %v1506 = vunpack.c.l.b16 %v936
    %v1507 = vunpack.c.h.b16 %v936
    %v1508 = vunpack.c.l.b16 %v937
    %v1509 = vunpack.c.h.b16 %v937
    %v1510 = vunpack.c.l.b16 %v938
    %v1511 = vunpack.c.h.b16 %v938
    %v1512 = vunpack.c.l.b16 %v939
    %v1513 = vunpack.c.h.b16 %v939
    %v1514 = vunpack.c.l.b16 %v940
    %v1515 = vunpack.c.l.b16 %v941
    %v1516 = vunpack.c.h.b16 %v941
    %v1517 = vunpack.c.l.b16 %v942
    %v1518 = vunpack.c.h.b16 %v942
    %v1519 = vunpack.c.l.b16 %v943
    %v1520 = vunpack.c.h.b16 %v943
    %v1521 = vunpack.c.l.b16 %v944
    %v1522 = vunpack.c.h.b16 %v944
    %v1523 = vunpack.c.l.b16 %v945
    %v1524 = vunpack.c.l.b16 %v946
    %v1525 = vunpack.c.h.b16 %v946
    %v1526 = vunpack.c.l.b16 %v947
    %v1527 = vunpack.c.h.b16 %v947
    %v1528 = vunpack.c.l.b16 %v948
    %v1529 = vunpack.c.h.b16 %v948
    %v1530 = vunpack.c.l.b16 %v949
    %v1531 = vunpack.c.h.b16 %v949
    %v1532 = vunpack.c.l.b16 %v950
    %v1533 = vpack.c.b16 %v1182, %v1173
    %v1534 = vpack.c.b16 %v1183, %v1174
    %v1535 = vpack.c.b16 %v1184, %v1175
    %v1536 = vpack.c.b16 %v1185, %v1176
    %v1537 = vpack.c.b16 %v1186, %v1177
    %v1538 = vpack.c.b16 %v1187, %v1178
    %v1539 = vpack.c.b16 %v1188, %v1179
    %v1540 = vpack.c.b16 %v1189, %v1180
    %v1541 = vpack.c.b16 %v1190, %v1181
    %v1542 = vpack.c.b16 %v1200, %v1191
    %v1543 = vpack.c.b16 %v1201, %v1192
    %v1544 = vpack.c.b16 %v1202, %v1193
    %v1545 = vpack.c.b16 %v1203, %v1194
    %v1546 = vpack.c.b16 %v1204, %v1195
    %v1547 = vpack.c.b16 %v1205, %v1196
    %v1548 = vpack.c.b16 %v1206, %v1197
    %v1549 = vpack.c.b16 %v1207, %v1198
    %v1550 = vpack.c.b16 %v1208, %v1199
    %v1551 = vpack.c.b16 %v1218, %v1209
    %v1552 = vpack.c.b16 %v1219, %v1210
    %v1553 = vpack.c.b16 %v1220, %v1211
    %v1554 = vpack.c.b16 %v1221, %v1212
    %v1555 = vpack.c.b16 %v1222, %v1213
    %v1556 = vpack.c.b16 %v1223, %v1214
    %v1557 = vpack.c.b16 %v1224, %v1215
    %v1558 = vpack.c.b16 %v1225, %v1216
    %v1559 = vpack.c.b16 %v1226, %v1217
    %v1560 = vpack.c.b16 %v1236, %v1227
    %v1561 = vpack.c.b16 %v1237, %v1228
    %v1562 = vpack.c.b16 %v1238, %v1229
    %v1563 = vpack.c.b16 %v1239, %v1230
    %v1564 = vpack.c.b16 %v1240, %v1231
    %v1565 = vpack.c.b16 %v1241, %v1232
    %v1566 = vpack.c.b16 %v1242, %v1233
    %v1567 = vpack.c.b16 %v1243, %v1234
    %v1568 = vpack.c.b16 %v1244, %v1235
    %v1569 = vpack.c.b16 %v1254, %v1245
    %v1570 = vpack.c.b16 %v1255, %v1246
    %v1571 = vpack.c.b16 %v1256, %v1247
    %v1572 = vpack.c.b16 %v1257, %v1248
    %v1573 = vpack.c.b16 %v1258, %v1249
    %v1574 = vpack.c.b16 %v1259, %v1250
    %v1575 = vpack.c.b16 %v1260, %v1251
    %v1576 = vpack.c.b16 %v1261, %v1252
    %v1577 = vpack.c.b16 %v1262, %v1253
    %v1578 = vpack.c.b16 %v1272, %v1263
    %v1579 = vpack.c.b16 %v1273, %v1264
    %v1580 = vpack.c.b16 %v1274, %v1265
    %v1581 = vpack.c.b16 %v1275, %v1266
    %v1582 = vpack.c.b16 %v1276, %v1267
    %v1583 = vpack.c.b16 %v1277, %v1268
    %v1584 = vpack.c.b16 %v1278, %v1269
    %v1585 = vpack.c.b16 %v1279, %v1270
    %v1586 = vpack.c.b16 %v1280, %v1271
    %v1587 = vpack.c.b16 %v1290, %v1281
    %v1588 = vpack.c.b16 %v1291, %v1282
    %v1589 = vpack.c.b16 %v1292, %v1283
    %v1590 = vpack.c.b16 %v1293, %v1284
    %v1591 = vpack.c.b16 %v1294, %v1285
    %v1592 = vpack.c.b16 %v1295, %v1286
    %v1593 = vpack.c.b16 %v1296, %v1287
    %v1594 = vpack.c.b16 %v1297, %v1288
    %v1595 = vpack.c.b16 %v1298, %v1289
    %v1596 = vpack.c.b16 %v1308, %v1299
    %v1597 = vpack.c.b16 %v1309, %v1300
    %v1598 = vpack.c.b16 %v1310, %v1301
    %v1599 = vpack.c.b16 %v1311, %v1302
    %v1600 = vpack.c.b16 %v1312, %v1303
    %v1601 = vpack.c.b16 %v1313, %v1304
    %v1602 = vpack.c.b16 %v1314, %v1305
    %v1603 = vpack.c.b16 %v1315, %v1306
    %v1604 = vpack.c.b16 %v1316, %v1307
    %v1605 = vpack.c.b16 %v1326, %v1317
    %v1606 = vpack.c.b16 %v1327, %v1318
    %v1607 = vpack.c.b16 %v1328, %v1319
    %v1608 = vpack.c.b16 %v1329, %v1320
    %v1609 = vpack.c.b16 %v1330, %v1321
    %v1610 = vpack.c.b16 %v1331, %v1322
    %v1611 = vpack.c.b16 %v1332, %v1323
    %v1612 = vpack.c.b16 %v1333, %v1324
    %v1613 = vpack.c.b16 %v1334, %v1325
    %v1614 = vpack.c.b16 %v1344, %v1335
    %v1615 = vpack.c.b16 %v1345, %v1336
    %v1616 = vpack.c.b16 %v1346, %v1337
    %v1617 = vpack.c.b16 %v1347, %v1338
    %v1618 = vpack.c.b16 %v1348, %v1339
    %v1619 = vpack.c.b16 %v1349, %v1340
    %v1620 = vpack.c.b16 %v1350, %v1341
    %v1621 = vpack.c.b16 %v1351, %v1342
    %v1622 = vpack.c.b16 %v1352, %v1343
    %v1623 = vpack.c.b16 %v1362, %v1353
    %v1624 = vpack.c.b16 %v1363, %v1354
    %v1625 = vpack.c.b16 %v1364, %v1355
    %v1626 = vpack.c.b16 %v1365, %v1356
    %v1627 = vpack.c.b16 %v1366, %v1357
    %v1628 = vpack.c.b16 %v1367, %v1358
    %v1629 = vpack.c.b16 %v1368, %v1359
    %v1630 = vpack.c.b16 %v1369, %v1360
    %v1631 = vpack.c.b16 %v1370, %v1361
    %v1632 = vpack.c.b16 %v1380, %v1371
    %v1633 = vpack.c.b16 %v1381, %v1372
    %v1634 = vpack.c.b16 %v1382, %v1373
    %v1635 = vpack.c.b16 %v1383, %v1374
    %v1636 = vpack.c.b16 %v1384, %v1375
    %v1637 = vpack.c.b16 %v1385, %v1376
    %v1638 = vpack.c.b16 %v1386, %v1377
    %v1639 = vpack.c.b16 %v1387, %v1378
    %v1640 = vpack.c.b16 %v1388, %v1379
    %v1641 = vpack.c.b16 %v1398, %v1389
    %v1642 = vpack.c.b16 %v1399, %v1390
    %v1643 = vpack.c.b16 %v1400, %v1391
    %v1644 = vpack.c.b16 %v1401, %v1392
    %v1645 = vpack.c.b16 %v1402, %v1393
    %v1646 = vpack.c.b16 %v1403, %v1394
    %v1647 = vpack.c.b16 %v1404, %v1395
    %v1648 = vpack.c.b16 %v1405, %v1396
    %v1649 = vpack.c.b16 %v1406, %v1397
    %v1650 = vpack.c.b16 %v1416, %v1407
    %v1651 = vpack.c.b16 %v1417, %v1408
    %v1652 = vpack.c.b16 %v1418, %v1409
    %v1653 = vpack.c.b16 %v1419, %v1410
    %v1654 = vpack.c.b16 %v1420, %v1411
    %v1655 = vpack.c.b16 %v1421, %v1412
    %v1656 = vpack.c.b16 %v1422, %v1413
    %v1657 = vpack.c.b16 %v1423, %v1414
    %v1658 = vpack.c.b16 %v1424, %v1415
    %v1659 = vpack.c.b16 %v1434, %v1425
    %v1660 = vpack.c.b16 %v1435, %v1426
    %v1661 = vpack.c.b16 %v1436, %v1427
    %v1662 = vpack.c.b16 %v1437, %v1428
    %v1663 = vpack.c.b16 %v1438, %v1429
    %v1664 = vpack.c.b16 %v1439, %v1430
    %v1665 = vpack.c.b16 %v1440, %v1431
    %v1666 = vpack.c.b16 %v1441, %v1432
    %v1667 = vpack.c.b16 %v1442, %v1433
    %v1668 = vpack.c.b16 %v1452, %v1443
    %v1669 = vpack.c.b16 %v1453, %v1444
    %v1670 = vpack.c.b16 %v1454, %v1445
    %v1671 = vpack.c.b16 %v1455, %v1446
    %v1672 = vpack.c.b16 %v1456, %v1447
    %v1673 = vpack.c.b16 %v1457, %v1448
    %v1674 = vpack.c.b16 %v1458, %v1449
    %v1675 = vpack.c.b16 %v1459, %v1450
    %v1676 = vpack.c.b16 %v1460, %v1451
    %v1677 = vpack.c.b16 %v1470, %v1461
    %v1678 = vpack.c.b16 %v1471, %v1462
    %v1679 = vpack.c.b16 %v1472, %v1463
    %v1680 = vpack.c.b16 %v1473, %v1464
    %v1681 = vpack.c.b16 %v1474, %v1465
    %v1682 = vpack.c.b16 %v1475, %v1466
    %v1683 = vpack.c.b16 %v1476, %v1467
    %v1684 = vpack.c.b16 %v1477, %v1468
    %v1685 = vpack.c.b16 %v1478, %v1469
    %v1686 = vpack.c.b16 %v1488, %v1479
    %v1687 = vpack.c.b16 %v1489, %v1480
    %v1688 = vpack.c.b16 %v1490, %v1481
    %v1689 = vpack.c.b16 %v1491, %v1482
    %v1690 = vpack.c.b16 %v1492, %v1483
    %v1691 = vpack.c.b16 %v1493, %v1484
    %v1692 = vpack.c.b16 %v1494, %v1485
    %v1693 = vpack.c.b16 %v1495, %v1486
    %v1694 = vpack.c.b16 %v1496, %v1487
    %v1695 = vpack.c.b16 %v1506, %v1497
    %v1696 = vpack.c.b16 %v1507, %v1498
    %v1697 = vpack.c.b16 %v1508, %v1499
    %v1698 = vpack.c.b16 %v1509, %v1500
    %v1699 = vpack.c.b16 %v1510, %v1501
    %v1700 = vpack.c.b16 %v1511, %v1502
    %v1701 = vpack.c.b16 %v1512, %v1503
    %v1702 = vpack.c.b16 %v1513, %v1504
    %v1703 = vpack.c.b16 %v1514, %v1505
    %v1704 = vpack.c.b16 %v1524, %v1515
    %v1705 = vpack.c.b16 %v1525, %v1516
    %v1706 = vpack.c.b16 %v1526, %v1517
    %v1707 = vpack.c.b16 %v1527, %v1518
    %v1708 = vpack.c.b16 %v1528, %v1519
    %v1709 = vpack.c.b16 %v1529, %v1520
    %v1710 = vpack.c.b16 %v1530, %v1521
    %v1711 = vpack.c.b16 %v1531, %v1522
    %v1712 = vpack.c.b16 %v1532, %v1523
    %v1894 = vsel %vm682, %v750, 0
    %1896 = vmatpush.bf16.msra.mxu0 %v1596
    %1897 = vmatpush.bf16.msra.mxu0 %v1587
    %1898 = vmatpush.bf16.msra.mxu0 %v1578
    %1899 = vmatpush.bf16.msra.mxu0 %v1569
    %1900 = vmatpush.bf16.msra.mxu0 %v1560
    %1901 = vmatpush.bf16.msra.mxu0 %v1551
    %1902 = vmatpush.bf16.msra.mxu0 %v1542
    %1903 = vmatpush.bf16.msra.mxu0 %v1533
    %1904 = vmatmul.bf16.gmra.mxu0 %v748
    %v1905 = vpop.f32.mrf.mxu0
    %v1906 = vadd.f32 %v955, %v1905
    %v1907 = vpop.f32.mrf.mxu0
    %v1908 = vadd.f32 %v955, %v1907
    %1909 = vdwg.mxu0
    %1910 = vmatpush.bf16.msra.mxu0 %v1668
    %1911 = vmatpush.bf16.msra.mxu0 %v1659
    %1912 = vmatpush.bf16.msra.mxu0 %v1650
    %1913 = vmatpush.bf16.msra.mxu0 %v1641
    %1914 = vmatpush.bf16.msra.mxu0 %v1632
    %1915 = vmatpush.bf16.msra.mxu0 %v1623
    %1916 = vmatpush.bf16.msra.mxu0 %v1614
    %1917 = vmatpush.bf16.msra.mxu0 %v1605
    %1918 = vmatmul.bf16.gmra.mxu0 %v749
    %v1919 = vpop.f32.mrf.mxu0
    %v1920 = vadd.f32 %v1906, %v1919
    %v1921 = vpop.f32.mrf.mxu0
    %v1922 = vadd.f32 %v1908, %v1921
    %1923 = vdwg.mxu0
    %1924 = vmatpush.bf16.msra.mxu0 0
    %1925 = vmatpush.bf16.msra.mxu0 0
    %1926 = vmatpush.bf16.msra.mxu0 0
    %1927 = vmatpush.bf16.msra.mxu0 0
    %1928 = vmatpush.bf16.msra.mxu0 %v1704
    %1929 = vmatpush.bf16.msra.mxu0 %v1695
    %1930 = vmatpush.bf16.msra.mxu0 %v1686
    %1931 = vmatpush.bf16.msra.mxu0 %v1677
    %1932 = vmatmul.bf16.gmra.mxu0 %v1894
    %v1933 = vpop.f32.mrf.mxu0
    %v1934 = vadd.f32 %v1920, %v1933
    %v1935 = vpop.f32.mrf.mxu0
    %v1936 = vadd.f32 %v1922, %v1935
    %1937 = vdwg.mxu0
    %1938 = vmatpush.bf16.msra.mxu0 %v1597
    %1939 = vmatpush.bf16.msra.mxu0 %v1588
    %1940 = vmatpush.bf16.msra.mxu0 %v1579
    %1941 = vmatpush.bf16.msra.mxu0 %v1570
    %1942 = vmatpush.bf16.msra.mxu0 %v1561
    %1943 = vmatpush.bf16.msra.mxu0 %v1552
    %1944 = vmatpush.bf16.msra.mxu0 %v1543
    %1945 = vmatpush.bf16.msra.mxu0 %v1534
    %1946 = vmatmul.bf16.gmra.mxu0 %v748
    %v1947 = vpop.f32.mrf.mxu0
    %v1948 = vadd.f32 %v956, %v1947
    %v1949 = vpop.f32.mrf.mxu0
    %v1950 = vadd.f32 %v956, %v1949
    %1951 = vdwg.mxu0
    %1952 = vmatpush.bf16.msra.mxu0 %v1669
    %1953 = vmatpush.bf16.msra.mxu0 %v1660
    %1954 = vmatpush.bf16.msra.mxu0 %v1651
    %1955 = vmatpush.bf16.msra.mxu0 %v1642
    %1956 = vmatpush.bf16.msra.mxu0 %v1633
    %1957 = vmatpush.bf16.msra.mxu0 %v1624
    %1958 = vmatpush.bf16.msra.mxu0 %v1615
    %1959 = vmatpush.bf16.msra.mxu0 %v1606
    %1960 = vmatmul.bf16.gmra.mxu0 %v749
    %v1961 = vpop.f32.mrf.mxu0
    %v1962 = vadd.f32 %v1948, %v1961
    %v1963 = vpop.f32.mrf.mxu0
    %v1964 = vadd.f32 %v1950, %v1963
    %1965 = vdwg.mxu0
    %1966 = vmatpush.bf16.msra.mxu0 0
    %1967 = vmatpush.bf16.msra.mxu0 0
    %1968 = vmatpush.bf16.msra.mxu0 0
    %1969 = vmatpush.bf16.msra.mxu0 0
    %1970 = vmatpush.bf16.msra.mxu0 %v1705
    %1971 = vmatpush.bf16.msra.mxu0 %v1696
    %1972 = vmatpush.bf16.msra.mxu0 %v1687
    %1973 = vmatpush.bf16.msra.mxu0 %v1678
    %1974 = vmatmul.bf16.gmra.mxu0 %v1894
    %v1975 = vpop.f32.mrf.mxu0
    %v1976 = vadd.f32 %v1962, %v1975
    %v1977 = vpop.f32.mrf.mxu0
    %v1978 = vadd.f32 %v1964, %v1977
    %1979 = vdwg.mxu0
    %1980 = vmatpush.bf16.msra.mxu0 %v1598
    %1981 = vmatpush.bf16.msra.mxu0 %v1589
    %1982 = vmatpush.bf16.msra.mxu0 %v1580
    %1983 = vmatpush.bf16.msra.mxu0 %v1571
    %1984 = vmatpush.bf16.msra.mxu0 %v1562
    %1985 = vmatpush.bf16.msra.mxu0 %v1553
    %1986 = vmatpush.bf16.msra.mxu0 %v1544
    %1987 = vmatpush.bf16.msra.mxu0 %v1535
    %1988 = vmatmul.bf16.gmra.mxu0 %v748
    %v1989 = vpop.f32.mrf.mxu0
    %v1990 = vadd.f32 %v957, %v1989
    %v1991 = vpop.f32.mrf.mxu0
    %v1992 = vadd.f32 %v957, %v1991
    %1993 = vdwg.mxu0
    %1994 = vmatpush.bf16.msra.mxu0 %v1670
    %1995 = vmatpush.bf16.msra.mxu0 %v1661
    %1996 = vmatpush.bf16.msra.mxu0 %v1652
    %1997 = vmatpush.bf16.msra.mxu0 %v1643
    %1998 = vmatpush.bf16.msra.mxu0 %v1634
    %1999 = vmatpush.bf16.msra.mxu0 %v1625
    %2000 = vmatpush.bf16.msra.mxu0 %v1616
    %2001 = vmatpush.bf16.msra.mxu0 %v1607
    %2002 = vmatmul.bf16.gmra.mxu0 %v749
    %v2003 = vpop.f32.mrf.mxu0
    %v2004 = vadd.f32 %v1990, %v2003
    %v2005 = vpop.f32.mrf.mxu0
    %v2006 = vadd.f32 %v1992, %v2005
    %2007 = vdwg.mxu0
    %2008 = vmatpush.bf16.msra.mxu0 0
    %2009 = vmatpush.bf16.msra.mxu0 0
    %2010 = vmatpush.bf16.msra.mxu0 0
    %2011 = vmatpush.bf16.msra.mxu0 0
    %2012 = vmatpush.bf16.msra.mxu0 %v1706
    %2013 = vmatpush.bf16.msra.mxu0 %v1697
    %2014 = vmatpush.bf16.msra.mxu0 %v1688
    %2015 = vmatpush.bf16.msra.mxu0 %v1679
    %2016 = vmatmul.bf16.gmra.mxu0 %v1894
    %v2017 = vpop.f32.mrf.mxu0
    %v2018 = vadd.f32 %v2004, %v2017
    %v2019 = vpop.f32.mrf.mxu0
    %v2020 = vadd.f32 %v2006, %v2019
    %2021 = vdwg.mxu0
    %2022 = vmatpush.bf16.msra.mxu0 %v1599
    %2023 = vmatpush.bf16.msra.mxu0 %v1590
    %2024 = vmatpush.bf16.msra.mxu0 %v1581
    %2025 = vmatpush.bf16.msra.mxu0 %v1572
    %2026 = vmatpush.bf16.msra.mxu0 %v1563
    %2027 = vmatpush.bf16.msra.mxu0 %v1554
    %2028 = vmatpush.bf16.msra.mxu0 %v1545
    %2029 = vmatpush.bf16.msra.mxu0 %v1536
    %2030 = vmatmul.bf16.gmra.mxu0 %v748
    %v2031 = vpop.f32.mrf.mxu0
    %v2032 = vadd.f32 %v958, %v2031
    %v2033 = vpop.f32.mrf.mxu0
    %v2034 = vadd.f32 %v958, %v2033
    %2035 = vdwg.mxu0
    %2036 = vmatpush.bf16.msra.mxu0 %v1671
    %2037 = vmatpush.bf16.msra.mxu0 %v1662
    %2038 = vmatpush.bf16.msra.mxu0 %v1653
    %2039 = vmatpush.bf16.msra.mxu0 %v1644
    %2040 = vmatpush.bf16.msra.mxu0 %v1635
    %2041 = vmatpush.bf16.msra.mxu0 %v1626
    %2042 = vmatpush.bf16.msra.mxu0 %v1617
    %2043 = vmatpush.bf16.msra.mxu0 %v1608
    %2044 = vmatmul.bf16.gmra.mxu0 %v749
    %v2045 = vpop.f32.mrf.mxu0
    %v2046 = vadd.f32 %v2032, %v2045
    %v2047 = vpop.f32.mrf.mxu0
    %v2048 = vadd.f32 %v2034, %v2047
    %2049 = vdwg.mxu0
    %2050 = vmatpush.bf16.msra.mxu0 0
    %2051 = vmatpush.bf16.msra.mxu0 0
    %2052 = vmatpush.bf16.msra.mxu0 0
    %2053 = vmatpush.bf16.msra.mxu0 0
    %2054 = vmatpush.bf16.msra.mxu0 %v1707
    %2055 = vmatpush.bf16.msra.mxu0 %v1698
    %2056 = vmatpush.bf16.msra.mxu0 %v1689
    %2057 = vmatpush.bf16.msra.mxu0 %v1680
    %2058 = vmatmul.bf16.gmra.mxu0 %v1894
    %v2059 = vpop.f32.mrf.mxu0
    %v2060 = vadd.f32 %v2046, %v2059
    %v2061 = vpop.f32.mrf.mxu0
    %v2062 = vadd.f32 %v2048, %v2061
    %2063 = vdwg.mxu0
    %2064 = vmatpush.bf16.msra.mxu0 %v1600
    %2065 = vmatpush.bf16.msra.mxu0 %v1591
    %2066 = vmatpush.bf16.msra.mxu0 %v1582
    %2067 = vmatpush.bf16.msra.mxu0 %v1573
    %2068 = vmatpush.bf16.msra.mxu0 %v1564
    %2069 = vmatpush.bf16.msra.mxu0 %v1555
    %2070 = vmatpush.bf16.msra.mxu0 %v1546
    %2071 = vmatpush.bf16.msra.mxu0 %v1537
    %2072 = vmatmul.bf16.gmra.mxu0 %v748
    %v2073 = vpop.f32.mrf.mxu0
    %v2074 = vadd.f32 %v959, %v2073
    %v2075 = vpop.f32.mrf.mxu0
    %v2076 = vadd.f32 %v959, %v2075
    %2077 = vdwg.mxu0
    %2078 = vmatpush.bf16.msra.mxu0 %v1672
    %2079 = vmatpush.bf16.msra.mxu0 %v1663
    %2080 = vmatpush.bf16.msra.mxu0 %v1654
    %2081 = vmatpush.bf16.msra.mxu0 %v1645
    %2082 = vmatpush.bf16.msra.mxu0 %v1636
    %2083 = vmatpush.bf16.msra.mxu0 %v1627
    %2084 = vmatpush.bf16.msra.mxu0 %v1618
    %2085 = vmatpush.bf16.msra.mxu0 %v1609
    %2086 = vmatmul.bf16.gmra.mxu0 %v749
    %v2087 = vpop.f32.mrf.mxu0
    %v2088 = vadd.f32 %v2074, %v2087
    %v2089 = vpop.f32.mrf.mxu0
    %v2090 = vadd.f32 %v2076, %v2089
    %2091 = vdwg.mxu0
    %2092 = vmatpush.bf16.msra.mxu0 0
    %2093 = vmatpush.bf16.msra.mxu0 0
    %2094 = vmatpush.bf16.msra.mxu0 0
    %2095 = vmatpush.bf16.msra.mxu0 0
    %2096 = vmatpush.bf16.msra.mxu0 %v1708
    %2097 = vmatpush.bf16.msra.mxu0 %v1699
    %2098 = vmatpush.bf16.msra.mxu0 %v1690
    %2099 = vmatpush.bf16.msra.mxu0 %v1681
    %2100 = vmatmul.bf16.gmra.mxu0 %v1894
    %v2101 = vpop.f32.mrf.mxu0
    %v2102 = vadd.f32 %v2088, %v2101
    %v2103 = vpop.f32.mrf.mxu0
    %v2104 = vadd.f32 %v2090, %v2103
    %2105 = vdwg.mxu0
    %2106 = vmatpush.bf16.msra.mxu0 %v1601
    %2107 = vmatpush.bf16.msra.mxu0 %v1592
    %2108 = vmatpush.bf16.msra.mxu0 %v1583
    %2109 = vmatpush.bf16.msra.mxu0 %v1574
    %2110 = vmatpush.bf16.msra.mxu0 %v1565
    %2111 = vmatpush.bf16.msra.mxu0 %v1556
    %2112 = vmatpush.bf16.msra.mxu0 %v1547
    %2113 = vmatpush.bf16.msra.mxu0 %v1538
    %2114 = vmatmul.bf16.gmra.mxu0 %v748
    %v2115 = vpop.f32.mrf.mxu0
    %v2116 = vadd.f32 %v960, %v2115
    %v2117 = vpop.f32.mrf.mxu0
    %v2118 = vadd.f32 %v960, %v2117
    %2119 = vdwg.mxu0
    %2120 = vmatpush.bf16.msra.mxu0 %v1673
    %2121 = vmatpush.bf16.msra.mxu0 %v1664
    %2122 = vmatpush.bf16.msra.mxu0 %v1655
    %2123 = vmatpush.bf16.msra.mxu0 %v1646
    %2124 = vmatpush.bf16.msra.mxu0 %v1637
    %2125 = vmatpush.bf16.msra.mxu0 %v1628
    %2126 = vmatpush.bf16.msra.mxu0 %v1619
    %2127 = vmatpush.bf16.msra.mxu0 %v1610
    %2128 = vmatmul.bf16.gmra.mxu0 %v749
    %v2129 = vpop.f32.mrf.mxu0
    %v2130 = vadd.f32 %v2116, %v2129
    %v2131 = vpop.f32.mrf.mxu0
    %v2132 = vadd.f32 %v2118, %v2131
    %2133 = vdwg.mxu0
    %2134 = vmatpush.bf16.msra.mxu0 0
    %2135 = vmatpush.bf16.msra.mxu0 0
    %2136 = vmatpush.bf16.msra.mxu0 0
    %2137 = vmatpush.bf16.msra.mxu0 0
    %2138 = vmatpush.bf16.msra.mxu0 %v1709
    %2139 = vmatpush.bf16.msra.mxu0 %v1700
    %2140 = vmatpush.bf16.msra.mxu0 %v1691
    %2141 = vmatpush.bf16.msra.mxu0 %v1682
    %2142 = vmatmul.bf16.gmra.mxu0 %v1894
    %v2143 = vpop.f32.mrf.mxu0
    %v2144 = vadd.f32 %v2130, %v2143
    %v2145 = vpop.f32.mrf.mxu0
    %v2146 = vadd.f32 %v2132, %v2145
    %2147 = vdwg.mxu0
    %2148 = vmatpush.bf16.msra.mxu0 %v1602
    %2149 = vmatpush.bf16.msra.mxu0 %v1593
    %2150 = vmatpush.bf16.msra.mxu0 %v1584
    %2151 = vmatpush.bf16.msra.mxu0 %v1575
    %2152 = vmatpush.bf16.msra.mxu0 %v1566
    %2153 = vmatpush.bf16.msra.mxu0 %v1557
    %2154 = vmatpush.bf16.msra.mxu0 %v1548
    %2155 = vmatpush.bf16.msra.mxu0 %v1539
    %2156 = vmatmul.bf16.gmra.mxu0 %v748
    %v2157 = vpop.f32.mrf.mxu0
    %v2158 = vadd.f32 %v961, %v2157
    %v2159 = vpop.f32.mrf.mxu0
    %v2160 = vadd.f32 %v961, %v2159
    %2161 = vdwg.mxu0
    %2162 = vmatpush.bf16.msra.mxu0 %v1674
    %2163 = vmatpush.bf16.msra.mxu0 %v1665
    %2164 = vmatpush.bf16.msra.mxu0 %v1656
    %2165 = vmatpush.bf16.msra.mxu0 %v1647
    %2166 = vmatpush.bf16.msra.mxu0 %v1638
    %2167 = vmatpush.bf16.msra.mxu0 %v1629
    %2168 = vmatpush.bf16.msra.mxu0 %v1620
    %2169 = vmatpush.bf16.msra.mxu0 %v1611
    %2170 = vmatmul.bf16.gmra.mxu0 %v749
    %v2171 = vpop.f32.mrf.mxu0
    %v2172 = vadd.f32 %v2158, %v2171
    %v2173 = vpop.f32.mrf.mxu0
    %v2174 = vadd.f32 %v2160, %v2173
    %2175 = vdwg.mxu0
    %2176 = vmatpush.bf16.msra.mxu0 0
    %2177 = vmatpush.bf16.msra.mxu0 0
    %2178 = vmatpush.bf16.msra.mxu0 0
    %2179 = vmatpush.bf16.msra.mxu0 0
    %2180 = vmatpush.bf16.msra.mxu0 %v1710
    %2181 = vmatpush.bf16.msra.mxu0 %v1701
    %2182 = vmatpush.bf16.msra.mxu0 %v1692
    %2183 = vmatpush.bf16.msra.mxu0 %v1683
    %2184 = vmatmul.bf16.gmra.mxu0 %v1894
    %v2185 = vpop.f32.mrf.mxu0
    %v2186 = vadd.f32 %v2172, %v2185
    %v2187 = vpop.f32.mrf.mxu0
    %v2188 = vadd.f32 %v2174, %v2187
    %2189 = vdwg.mxu0
    %2190 = vmatpush.bf16.msra.mxu0 %v1603
    %2191 = vmatpush.bf16.msra.mxu0 %v1594
    %2192 = vmatpush.bf16.msra.mxu0 %v1585
    %2193 = vmatpush.bf16.msra.mxu0 %v1576
    %2194 = vmatpush.bf16.msra.mxu0 %v1567
    %2195 = vmatpush.bf16.msra.mxu0 %v1558
    %2196 = vmatpush.bf16.msra.mxu0 %v1549
    %2197 = vmatpush.bf16.msra.mxu0 %v1540
    %2198 = vmatmul.bf16.gmra.mxu0 %v748
    %v2199 = vpop.f32.mrf.mxu0
    %v2200 = vadd.f32 %v962, %v2199
    %v2201 = vpop.f32.mrf.mxu0
    %v2202 = vadd.f32 %v962, %v2201
    %2203 = vdwg.mxu0
    %2204 = vmatpush.bf16.msra.mxu0 %v1675
    %2205 = vmatpush.bf16.msra.mxu0 %v1666
    %2206 = vmatpush.bf16.msra.mxu0 %v1657
    %2207 = vmatpush.bf16.msra.mxu0 %v1648
    %2208 = vmatpush.bf16.msra.mxu0 %v1639
    %2209 = vmatpush.bf16.msra.mxu0 %v1630
    %2210 = vmatpush.bf16.msra.mxu0 %v1621
    %2211 = vmatpush.bf16.msra.mxu0 %v1612
    %2212 = vmatmul.bf16.gmra.mxu0 %v749
    %v2213 = vpop.f32.mrf.mxu0
    %v2214 = vadd.f32 %v2200, %v2213
    %v2215 = vpop.f32.mrf.mxu0
    %v2216 = vadd.f32 %v2202, %v2215
    %2217 = vdwg.mxu0
    %2218 = vmatpush.bf16.msra.mxu0 0
    %2219 = vmatpush.bf16.msra.mxu0 0
    %2220 = vmatpush.bf16.msra.mxu0 0
    %2221 = vmatpush.bf16.msra.mxu0 0
    %2222 = vmatpush.bf16.msra.mxu0 %v1711
    %2223 = vmatpush.bf16.msra.mxu0 %v1702
    %2224 = vmatpush.bf16.msra.mxu0 %v1693
    %2225 = vmatpush.bf16.msra.mxu0 %v1684
    %2226 = vmatmul.bf16.gmra.mxu0 %v1894
    %v2227 = vpop.f32.mrf.mxu0
    %v2228 = vadd.f32 %v2214, %v2227
    %v2229 = vpop.f32.mrf.mxu0
    %v2230 = vadd.f32 %v2216, %v2229
    %2231 = vdwg.mxu0
    %2232 = vmatpush.bf16.msra.mxu0 %v1604
    %2233 = vmatpush.bf16.msra.mxu0 %v1595
    %2234 = vmatpush.bf16.msra.mxu0 %v1586
    %2235 = vmatpush.bf16.msra.mxu0 %v1577
    %2236 = vmatpush.bf16.msra.mxu0 %v1568
    %2237 = vmatpush.bf16.msra.mxu0 %v1559
    %2238 = vmatpush.bf16.msra.mxu0 %v1550
    %2239 = vmatpush.bf16.msra.mxu0 %v1541
    %2240 = vmatmul.bf16.gmra.mxu0 %v748
    %v2241 = vpop.f32.mrf.mxu0
    %v2242 = vadd.f32 %v963, %v2241
    %v2243 = vpop.f32.mrf.mxu0
    %v2244 = vadd.f32 %v963, %v2243
    %2245 = vdwg.mxu0
    %2246 = vmatpush.bf16.msra.mxu0 %v1676
    %2247 = vmatpush.bf16.msra.mxu0 %v1667
    %2248 = vmatpush.bf16.msra.mxu0 %v1658
    %2249 = vmatpush.bf16.msra.mxu0 %v1649
    %2250 = vmatpush.bf16.msra.mxu0 %v1640
    %2251 = vmatpush.bf16.msra.mxu0 %v1631
    %2252 = vmatpush.bf16.msra.mxu0 %v1622
    %2253 = vmatpush.bf16.msra.mxu0 %v1613
    %2254 = vmatmul.bf16.gmra.mxu0 %v749
    %v2255 = vpop.f32.mrf.mxu0
    %v2256 = vadd.f32 %v2242, %v2255
    %v2257 = vpop.f32.mrf.mxu0
    %v2258 = vadd.f32 %v2244, %v2257
    %2259 = vdwg.mxu0
    %2260 = vmatpush.bf16.msra.mxu0 0
    %2261 = vmatpush.bf16.msra.mxu0 0
    %2262 = vmatpush.bf16.msra.mxu0 0
    %2263 = vmatpush.bf16.msra.mxu0 0
    %2264 = vmatpush.bf16.msra.mxu0 %v1712
    %2265 = vmatpush.bf16.msra.mxu0 %v1703
    %2266 = vmatpush.bf16.msra.mxu0 %v1694
    %2267 = vmatpush.bf16.msra.mxu0 %v1685
    %2268 = vmatmul.bf16.gmra.mxu0 %v1894
    %v2269 = vpop.f32.mrf.mxu0
    %v2270 = vadd.f32 %v2256, %v2269
    %v2271 = vpop.f32.mrf.mxu0
    %v2272 = vadd.f32 %v2258, %v2271
    %2273 = vdwg.mxu0
    %v2274 = vpack.c.bf16 %v1976, %v1934
    %v2275 = vpack.c.bf16 %v2060, %v2018
    %v2276 = vpack.c.bf16 %v2144, %v2102
    %v2277 = vpack.c.bf16 %v2228, %v2186
    %v2278 = vpack.c.bf16 %v2270, %v2270
    %v2279 = vpack.c.bf16 %v1978, %v1936
    %v2280 = vpack.c.bf16 %v2062, %v2020
    %v2281 = vpack.c.bf16 %v2146, %v2104
    %v2282 = vpack.c.bf16 %v2230, %v2188
    %v2283 = vpack.c.bf16 %v2272, %v2272
    %2284 = vst [vmem:[#allocation5] sm:$0xff] %v2274
    %2285 = vst [vmem:[#allocation5 + $0x8] sm:$0xff] %v2275
    %2286 = vst [vmem:[#allocation5 + $0x10] sm:$0xff] %v2276
    %2287 = vst [vmem:[#allocation5 + $0x18] sm:$0xff] %v2277
    %vm2288 = vcmask 715776
    %2289 = vst.msk [vmem:[#allocation5 + $0x20] sm:$0xf] %vm2288, %v2278
    %2290 = vst [vmem:[#allocation5 + $0x24] sm:$0xff] %v2279
    %2291 = vst [vmem:[#allocation5 + $0x2c] sm:$0xff] %v2280
    %2292 = vst [vmem:[#allocation5 + $0x34] sm:$0xff] %v2281
    %2293 = vst [vmem:[#allocation5 + $0x3c] sm:$0xff] %v2282
    %2294 = vst.msk [vmem:[#allocation5 + $0x44] sm:$0xf] %vm2288, %v2283
    %v2295 = vld [vmem:[%s11] sm:$0xf]
    %v2296 = vld [vmem:[%s11 + $0x4] sm:$0xf]
    %v2297 = vld [vmem:[%s11 + $0x8] sm:$0xf]
    %v2298 = vld [vmem:[%s11 + $0xc] sm:$0xf]
    %v2299 = vld [vmem:[%s11 + $0x10] sm:$0xf]
    %v2300 = vld [vmem:[%s11 + $0x14] sm:$0xf]
    %v2301 = vld [vmem:[%s11 + $0x18] sm:$0xf]
    %v2302 = vld [vmem:[%s11 + $0x1c] sm:$0xf]
    %v2303 = vld [vmem:[%s11 + $0x20] sm:$0xf]
    %v2304 = vld [vmem:[%s11 + $0x24] sm:$0xf]
    %v2305 = vld [vmem:[%s11 + $0x28] sm:$0xf]
    %v2306 = vld [vmem:[%s11 + $0x2c] sm:$0xf]
    %v2307 = vld [vmem:[%s11 + $0x30] sm:$0xf]
    %v2308 = vld [vmem:[%s11 + $0x34] sm:$0xf]
    %v2309 = vld [vmem:[%s11 + $0x38] sm:$0xf]
    %v2310 = vld [vmem:[%s11 + $0x3c] sm:$0xf]
    %v2311 = vld [vmem:[%s11 + $0x40] sm:$0xf]
    %v2312 = vld [vmem:[%s11 + $0x44] sm:$0xf]
    %v2313 = vld [vmem:[%s11 + $0x48] sm:$0xf]
    %v2314 = vld [vmem:[%s11 + $0x4c] sm:$0xf]
    %v2315 = vld [vmem:[%s11 + $0x50] sm:$0xf]
    %v2316 = vld [vmem:[%s11 + $0x54] sm:$0xf]
    %v2317 = vld [vmem:[%s11 + $0x58] sm:$0xf]
    %v2318 = vld [vmem:[%s11 + $0x5c] sm:$0xf]
    %v2319 = vld [vmem:[%s11 + $0x60] sm:$0xf]
    %v2320 = vld [vmem:[%s11 + $0x64] sm:$0xf]
    %v2321 = vld [vmem:[%s11 + $0x68] sm:$0xf]
    %v2322 = vld [vmem:[%s11 + $0x6c] sm:$0xf]
    %v2323 = vld [vmem:[%s11 + $0x70] sm:$0xf]
    %v2324 = vld [vmem:[%s11 + $0x74] sm:$0xf]
    %v2325 = vld [vmem:[%s11 + $0x78] sm:$0xf]
    %v2326 = vld [vmem:[%s11 + $0x7c] sm:$0xf]
    %v2327 = vld [vmem:[%s11 + $0x80] sm:$0xf]
    %v2328 = vld [vmem:[%s11 + $0x84] sm:$0xf]
    %v2329 = vld [vmem:[%s11 + $0x88] sm:$0xf]
    %v2330 = vld [vmem:[%s11 + $0x8c] sm:$0xf]
    %v2331 = vld [vmem:[%s11 + $0x90] sm:$0xf]
    %v2332 = vld [vmem:[%s11 + $0x94] sm:$0xf]
    %v2333 = vld [vmem:[%s11 + $0x98] sm:$0xf]
    %v2334 = vld [vmem:[%s11 + $0x9c] sm:$0xf]
    %v2335 = vld [vmem:[%s12] sm:$0x1]
    %v2337 = vperm.slane %v2335, 0
    %v2379 = vunpack.c.l.b16 %v2295
    %v2380 = vunpack.c.l.b16 %v2296
    %v2381 = vunpack.c.l.b16 %v2297
    %v2382 = vunpack.c.l.b16 %v2298
    %v2383 = vunpack.c.l.b16 %v2299
    %v2384 = vunpack.c.l.b16 %v2300
    %v2385 = vunpack.c.l.b16 %v2301
    %v2386 = vunpack.c.l.b16 %v2302
    %v2387 = vunpack.c.l.b16 %v2303
    %v2388 = vunpack.c.l.b16 %v2304
    %v2389 = vunpack.c.l.b16 %v2305
    %v2390 = vunpack.c.l.b16 %v2306
    %v2391 = vunpack.c.l.b16 %v2307
    %v2392 = vunpack.c.l.b16 %v2308
    %v2393 = vunpack.c.l.b16 %v2309
    %v2394 = vunpack.c.l.b16 %v2310
    %v2395 = vunpack.c.l.b16 %v2311
    %v2396 = vunpack.c.l.b16 %v2312
    %v2397 = vunpack.c.l.b16 %v2313
    %v2398 = vunpack.c.l.b16 %v2314
    %v2399 = vunpack.c.l.b16 %v2315
    %v2400 = vunpack.c.l.b16 %v2316
    %v2401 = vunpack.c.l.b16 %v2317
    %v2402 = vunpack.c.l.b16 %v2318
    %v2403 = vunpack.c.l.b16 %v2319
    %v2404 = vunpack.c.l.b16 %v2320
    %v2405 = vunpack.c.l.b16 %v2321
    %v2406 = vunpack.c.l.b16 %v2322
    %v2407 = vunpack.c.l.b16 %v2323
    %v2408 = vunpack.c.l.b16 %v2324
    %v2409 = vunpack.c.l.b16 %v2325
    %v2410 = vunpack.c.l.b16 %v2326
    %v2411 = vunpack.c.l.b16 %v2327
    %v2412 = vunpack.c.l.b16 %v2328
    %v2413 = vunpack.c.l.b16 %v2329
    %v2414 = vunpack.c.l.b16 %v2330
    %v2415 = vunpack.c.l.b16 %v2331
    %v2416 = vunpack.c.l.b16 %v2332
    %v2417 = vunpack.c.l.b16 %v2333
    %v2418 = vunpack.c.l.b16 %v2334
    %v2419 = vpack.c.b16 %v2380, %v2379
    %v2420 = vpack.c.b16 %v2382, %v2381
    %v2421 = vpack.c.b16 %v2384, %v2383
    %v2422 = vpack.c.b16 %v2386, %v2385
    %v2423 = vpack.c.b16 %v2388, %v2387
    %v2424 = vpack.c.b16 %v2390, %v2389
    %v2425 = vpack.c.b16 %v2392, %v2391
    %v2426 = vpack.c.b16 %v2394, %v2393
    %v2427 = vpack.c.b16 %v2396, %v2395
    %v2428 = vpack.c.b16 %v2398, %v2397
    %v2429 = vpack.c.b16 %v2400, %v2399
    %v2430 = vpack.c.b16 %v2402, %v2401
    %v2431 = vpack.c.b16 %v2404, %v2403
    %v2432 = vpack.c.b16 %v2406, %v2405
    %v2433 = vpack.c.b16 %v2408, %v2407
    %v2434 = vpack.c.b16 %v2410, %v2409
    %v2435 = vpack.c.b16 %v2412, %v2411
    %v2436 = vpack.c.b16 %v2414, %v2413
    %v2437 = vpack.c.b16 %v2416, %v2415
    %v2438 = vpack.c.b16 %v2418, %v2417
    %2459 = vmatpush.bf16.msra.mxu0 %v2426
    %2460 = vmatpush.bf16.msra.mxu0 %v2425
    %2461 = vmatpush.bf16.msra.mxu0 %v2424
    %2462 = vmatpush.bf16.msra.mxu0 %v2423
    %2463 = vmatpush.bf16.msra.mxu0 %v2422
    %2464 = vmatpush.bf16.msra.mxu0 %v2421
    %2465 = vmatpush.bf16.msra.mxu0 %v2420
    %2466 = vmatpush.bf16.msra.mxu0 %v2419
    %2467 = vmatmul.bf16.gmra.mxu0 %v748
    %v2468 = vpop.f32.mrf.mxu0
    %v2469 = vadd.f32 %v2337, %v2468
    %v2470 = vpop.f32.mrf.mxu0
    %v2471 = vadd.f32 %v2337, %v2470
    %2472 = vdwg.mxu0
    %2473 = vmatpush.bf16.msra.mxu0 %v2434
    %2474 = vmatpush.bf16.msra.mxu0 %v2433
    %2475 = vmatpush.bf16.msra.mxu0 %v2432
    %2476 = vmatpush.bf16.msra.mxu0 %v2431
    %2477 = vmatpush.bf16.msra.mxu0 %v2430
    %2478 = vmatpush.bf16.msra.mxu0 %v2429
    %2479 = vmatpush.bf16.msra.mxu0 %v2428
    %2480 = vmatpush.bf16.msra.mxu0 %v2427
    %2481 = vmatmul.bf16.gmra.mxu0 %v749
    %v2482 = vpop.f32.mrf.mxu0
    %v2483 = vadd.f32 %v2469, %v2482
    %v2484 = vpop.f32.mrf.mxu0
    %v2485 = vadd.f32 %v2471, %v2484
    %2486 = vdwg.mxu0
    %2487 = vmatpush.bf16.msra.mxu0 0
    %2488 = vmatpush.bf16.msra.mxu0 0
    %2489 = vmatpush.bf16.msra.mxu0 0
    %2490 = vmatpush.bf16.msra.mxu0 0
    %2491 = vmatpush.bf16.msra.mxu0 %v2438
    %2492 = vmatpush.bf16.msra.mxu0 %v2437
    %2493 = vmatpush.bf16.msra.mxu0 %v2436
    %2494 = vmatpush.bf16.msra.mxu0 %v2435
    %2495 = vmatmul.bf16.gmra.mxu0 %v1894
    %v2496 = vpop.f32.mrf.mxu0
    %v2497 = vadd.f32 %v2483, %v2496
    %v2498 = vpop.f32.mrf.mxu0
    %v2499 = vadd.f32 %v2485, %v2498
    %2500 = vdwg.mxu0
    %v2501 = vpack.c.bf16 %v2497, %v2497
    %v2502 = vpack.c.bf16 %v2499, %v2499
    %vm2503 = vcmask 60416
    %2504 = vst.msk [vmem:[%s16] sm:$0xf] %vm2503, %v2501
    %2505 = vst.msk [vmem:[%s16 + $0x4] sm:$0xf] %vm2503, %v2502
    %v2506 = vld [vmem:[%s13] sm:$0xf]
    %v2507 = vld [vmem:[%s13 + $0x4] sm:$0xf]
    %v2508 = vld [vmem:[%s13 + $0x8] sm:$0xf]
    %v2509 = vld [vmem:[%s13 + $0xc] sm:$0xf]
    %v2510 = vld [vmem:[%s13 + $0x10] sm:$0xf]
    %v2511 = vld [vmem:[%s13 + $0x14] sm:$0xf]
    %v2512 = vld [vmem:[%s13 + $0x18] sm:$0xf]
    %v2513 = vld [vmem:[%s13 + $0x1c] sm:$0xf]
    %v2514 = vld [vmem:[%s13 + $0x20] sm:$0xf]
    %v2515 = vld [vmem:[%s13 + $0x24] sm:$0xf]
    %v2516 = vld [vmem:[%s13 + $0x28] sm:$0xf]
    %v2517 = vld [vmem:[%s13 + $0x2c] sm:$0xf]
    %v2518 = vld [vmem:[%s13 + $0x30] sm:$0xf]
    %v2519 = vld [vmem:[%s13 + $0x34] sm:$0xf]
    %v2520 = vld [vmem:[%s13 + $0x38] sm:$0xf]
    %v2521 = vld [vmem:[%s13 + $0x3c] sm:$0xf]
    %v2522 = vld [vmem:[%s13 + $0x40] sm:$0xf]
    %v2523 = vld [vmem:[%s13 + $0x44] sm:$0xf]
    %v2524 = vld [vmem:[%s13 + $0x48] sm:$0xf]
    %v2525 = vld [vmem:[%s13 + $0x4c] sm:$0xf]
    %v2526 = vld [vmem:[%s13 + $0x50] sm:$0xf]
    %v2527 = vld [vmem:[%s13 + $0x54] sm:$0xf]
    %v2528 = vld [vmem:[%s13 + $0x58] sm:$0xf]
    %v2529 = vld [vmem:[%s13 + $0x5c] sm:$0xf]
    %v2530 = vld [vmem:[%s13 + $0x60] sm:$0xf]
    %v2531 = vld [vmem:[%s13 + $0x64] sm:$0xf]
    %v2532 = vld [vmem:[%s13 + $0x68] sm:$0xf]
    %v2533 = vld [vmem:[%s13 + $0x6c] sm:$0xf]
    %v2534 = vld [vmem:[%s13 + $0x70] sm:$0xf]
    %v2535 = vld [vmem:[%s13 + $0x74] sm:$0xf]
    %v2536 = vld [vmem:[%s13 + $0x78] sm:$0xf]
    %v2537 = vld [vmem:[%s13 + $0x7c] sm:$0xf]
    %v2538 = vld [vmem:[%s13 + $0x80] sm:$0xf]
    %v2539 = vld [vmem:[%s13 + $0x84] sm:$0xf]
    %v2540 = vld [vmem:[%s13 + $0x88] sm:$0xf]
    %v2541 = vld [vmem:[%s13 + $0x8c] sm:$0xf]
    %v2542 = vld [vmem:[%s13 + $0x90] sm:$0xf]
    %v2543 = vld [vmem:[%s13 + $0x94] sm:$0xf]
    %v2544 = vld [vmem:[%s13 + $0x98] sm:$0xf]
    %v2545 = vld [vmem:[%s13 + $0x9c] sm:$0xf]
    %v2546 = vld [vmem:[%s14] sm:$0x1]
    %v2548 = vperm.slane %v2546, 0
    %v2590 = vunpack.c.l.b16 %v2506
    %v2591 = vunpack.c.l.b16 %v2507
    %v2592 = vunpack.c.l.b16 %v2508
    %v2593 = vunpack.c.l.b16 %v2509
    %v2594 = vunpack.c.l.b16 %v2510
    %v2595 = vunpack.c.l.b16 %v2511
    %v2596 = vunpack.c.l.b16 %v2512
    %v2597 = vunpack.c.l.b16 %v2513
    %v2598 = vunpack.c.l.b16 %v2514
    %v2599 = vunpack.c.l.b16 %v2515
    %v2600 = vunpack.c.l.b16 %v2516
    %v2601 = vunpack.c.l.b16 %v2517
    %v2602 = vunpack.c.l.b16 %v2518
    %v2603 = vunpack.c.l.b16 %v2519
    %v2604 = vunpack.c.l.b16 %v2520
    %v2605 = vunpack.c.l.b16 %v2521
    %v2606 = vunpack.c.l.b16 %v2522
    %v2607 = vunpack.c.l.b16 %v2523
    %v2608 = vunpack.c.l.b16 %v2524
    %v2609 = vunpack.c.l.b16 %v2525
    %v2610 = vunpack.c.l.b16 %v2526
    %v2611 = vunpack.c.l.b16 %v2527
    %v2612 = vunpack.c.l.b16 %v2528
    %v2613 = vunpack.c.l.b16 %v2529
    %v2614 = vunpack.c.l.b16 %v2530
    %v2615 = vunpack.c.l.b16 %v2531
    %v2616 = vunpack.c.l.b16 %v2532
    %v2617 = vunpack.c.l.b16 %v2533
    %v2618 = vunpack.c.l.b16 %v2534
    %v2619 = vunpack.c.l.b16 %v2535
    %v2620 = vunpack.c.l.b16 %v2536
    %v2621 = vunpack.c.l.b16 %v2537
    %v2622 = vunpack.c.l.b16 %v2538
    %v2623 = vunpack.c.l.b16 %v2539
    %v2624 = vunpack.c.l.b16 %v2540
    %v2625 = vunpack.c.l.b16 %v2541
    %v2626 = vunpack.c.l.b16 %v2542
    %v2627 = vunpack.c.l.b16 %v2543
    %v2628 = vunpack.c.l.b16 %v2544
    %v2629 = vunpack.c.l.b16 %v2545
    %v2630 = vpack.c.b16 %v2591, %v2590
    %v2631 = vpack.c.b16 %v2593, %v2592
    %v2632 = vpack.c.b16 %v2595, %v2594
    %v2633 = vpack.c.b16 %v2597, %v2596
    %v2634 = vpack.c.b16 %v2599, %v2598
    %v2635 = vpack.c.b16 %v2601, %v2600
    %v2636 = vpack.c.b16 %v2603, %v2602
    %v2637 = vpack.c.b16 %v2605, %v2604
    %v2638 = vpack.c.b16 %v2607, %v2606
    %v2639 = vpack.c.b16 %v2609, %v2608
    %v2640 = vpack.c.b16 %v2611, %v2610
    %v2641 = vpack.c.b16 %v2613, %v2612
    %v2642 = vpack.c.b16 %v2615, %v2614
    %v2643 = vpack.c.b16 %v2617, %v2616
    %v2644 = vpack.c.b16 %v2619, %v2618
    %v2645 = vpack.c.b16 %v2621, %v2620
    %v2646 = vpack.c.b16 %v2623, %v2622
    %v2647 = vpack.c.b16 %v2625, %v2624
    %v2648 = vpack.c.b16 %v2627, %v2626
    %v2649 = vpack.c.b16 %v2629, %v2628
    %2670 = vmatpush.bf16.msra.mxu0 %v2637
    %2671 = vmatpush.bf16.msra.mxu0 %v2636
    %2672 = vmatpush.bf16.msra.mxu0 %v2635
    %2673 = vmatpush.bf16.msra.mxu0 %v2634
    %2674 = vmatpush.bf16.msra.mxu0 %v2633
    %2675 = vmatpush.bf16.msra.mxu0 %v2632
    %2676 = vmatpush.bf16.msra.mxu0 %v2631
    %2677 = vmatpush.bf16.msra.mxu0 %v2630
    %2678 = vmatmul.bf16.gmra.mxu0 %v748
    %v2679 = vpop.f32.mrf.mxu0
    %v2680 = vadd.f32 %v2548, %v2679
    %v2681 = vpop.f32.mrf.mxu0
    %v2682 = vadd.f32 %v2548, %v2681
    %2683 = vdwg.mxu0
    %2684 = vmatpush.bf16.msra.mxu0 %v2645
    %2685 = vmatpush.bf16.msra.mxu0 %v2644
    %2686 = vmatpush.bf16.msra.mxu0 %v2643
    %2687 = vmatpush.bf16.msra.mxu0 %v2642
    %2688 = vmatpush.bf16.msra.mxu0 %v2641
    %2689 = vmatpush.bf16.msra.mxu0 %v2640
    %2690 = vmatpush.bf16.msra.mxu0 %v2639
    %2691 = vmatpush.bf16.msra.mxu0 %v2638
    %2692 = vmatmul.bf16.gmra.mxu0 %v749
    %v2693 = vpop.f32.mrf.mxu0
    %v2694 = vadd.f32 %v2680, %v2693
    %v2695 = vpop.f32.mrf.mxu0
    %v2696 = vadd.f32 %v2682, %v2695
    %2697 = vdwg.mxu0
    %2698 = vmatpush.bf16.msra.mxu0 0
    %2699 = vmatpush.bf16.msra.mxu0 0
    %2700 = vmatpush.bf16.msra.mxu0 0
    %2701 = vmatpush.bf16.msra.mxu0 0
    %2702 = vmatpush.bf16.msra.mxu0 %v2649
    %2703 = vmatpush.bf16.msra.mxu0 %v2648
    %2704 = vmatpush.bf16.msra.mxu0 %v2647
    %2705 = vmatpush.bf16.msra.mxu0 %v2646
    %2706 = vmatmul.bf16.gmra.mxu0 %v1894
    %v2707 = vpop.f32.mrf.mxu0
    %v2708 = vadd.f32 %v2694, %v2707
    %v2709 = vpop.f32.mrf.mxu0
    %v2710 = vadd.f32 %v2696, %v2709
    %2711 = vdwg.mxu0
    %v2712 = vpack.c.bf16 %v2708, %v2708
    %v2713 = vpack.c.bf16 %v2710, %v2710
    %2714 = vst.msk [vmem:[%s17] sm:$0xf] %vm2503, %v2712
    %2715 = vst.msk [vmem:[%s17 + $0x4] sm:$0xf] %vm2503, %v2713
    // Predicated region
    $region66: #{mixnet_forward.1} parent=1 // pred_check
      _
    $region67: #{mixnet_forward.1} parent=1 // pred_check_branch
      %2717 = sbr.rel (0) target = $region69
    $region68: #{mixnet_forward.1} parent=1 // pred_region
      %2719 = vsyncadd [#allocation4], 0
      %s2720 = sshll.u32 [#allocation5], 4
      %s2721 = int_to_ptr.vmem [resolvable:$true] %s2720
      %s2722 = sshll.u32 %s15, 4
      %s2723 = int_to_ptr.hbm [resolvable:$true] %s2722
      %2728 = dma.vmem_to_hbm [thread:$0]  %s2721, 1152, %s2723, [#allocation4], 576, 576, 36
    $region69: #{mixnet_forward.1} parent=1 // pred_fallthru
      _
    // Predicated region
    $region70: #{mixnet_forward.1} parent=1 // pred_check
      _
    $region71: #{mixnet_forward.1} parent=1 // pred_check_branch
      %2730 = sbr.rel (0) target = $region73
    $region72: #{mixnet_forward.1} parent=1 // pred_region
      _
    $region73: #{mixnet_forward.1} parent=1 // pred_fallthru
      _
    // Predicated region
    $region74: #{mixnet_forward.1} parent=1 // pred_check
      _
    $region75: #{mixnet_forward.1} parent=1 // pred_check_branch
      %2732 = sbr.rel (0) target = $region77
    $region76: #{mixnet_forward.1} parent=1 // pred_region
      _
    $region77: #{mixnet_forward.1} parent=1 // pred_fallthru
      _
    // Predicated region
    $region78: #{mixnet_forward.1} parent=1 // pred_check
      _
    $region79: #{mixnet_forward.1} parent=1 // pred_check_branch
      %2734 = sbr.rel (0) target = $region81
    $region80: #{mixnet_forward.1} parent=1 // pred_region
      %2736 = dma.done [#allocation4], 1152
    $region81: #{mixnet_forward.1} parent=1 // pred_fallthru
      _
    // Predicated region
    $region82: #{mixnet_forward.1} parent=1 // pred_check
      _
    $region83: #{mixnet_forward.1} parent=1 // pred_check_branch
      %2738 = sbr.rel (0) target = $region85
    $region84: #{mixnet_forward.1} parent=1 // pred_region
      _
    $region85: #{mixnet_forward.1} parent=1 // pred_fallthru
      _
    // Predicated region
    $region86: #{mixnet_forward.1} parent=1 // pred_check
      _
    $region87: #{mixnet_forward.1} parent=1 // pred_check_branch
      %2740 = sbr.rel (0) target = $region89
    $region88: #{mixnet_forward.1} parent=1 // pred_region
      _
    $region89: #{mixnet_forward.1} parent=1 // pred_fallthru
      _
    %2741 = vsyncpa [#allocation3], 1
    %2742 = vsyncpa [#allocation4], 1

</llo_original>
